<compile_context>
chip_gen: v7x
topology: tpu7x:2x2x1
jax: 0.10.0
libtpu: 0.0.40
codegen_flags: <defaults>
</compile_context>

<pallas_src>
import functools

import jax
import jax.numpy as jnp
from jax.experimental import pallas as pl
from jax.experimental.pallas import tpu as pltpu


def _round_up(x, m):
    return (x + m - 1) // m * m


def _l2norm(v):
    # F.normalize(p=2, dim=1): v / max(||v||, 1e-12) == v * rsqrt(max(||v||^2, 1e-24))
    n2 = jnp.sum(v * v, axis=-1, keepdims=True)
    return v * jax.lax.rsqrt(jnp.maximum(n2, 1e-24))


def _fused_kernel(x_ref,
                  wemb_ref, bemb_ref,
                  w1_ref, b1_ref, w2_ref, b2_ref, w3_ref, b3_ref,
                  out_ref, *, smaller):
    x = x_ref[...]                                            # (tb, d1+d2), f32

    # One block-diagonal embedding push: [e1 | e2] = x_cat @ diag(W_a, W_b) + [b_a|b_b]
    # (f32 operands: embedding path kept full precision, cost is negligible).
    e = jnp.dot(x, wemb_ref[...], preferred_element_type=jnp.float32) + bemb_ref[...]

    # Per-half L2 norm via lane masks -- no lane-offset slicing of the input.
    lane = jax.lax.broadcasted_iota(jnp.int32, e.shape, 1)
    first = lane < smaller
    sq = e * e
    n1 = jnp.sum(jnp.where(first, sq, 0.0), axis=-1, keepdims=True)
    n2 = jnp.sum(sq, axis=-1, keepdims=True) - n1
    # F.normalize eps: v * rsqrt(max(||v||^2, 1e-24)).  Padded (all-zero) batch rows
    # give 0 * rsqrt(1e-24) = 0 -- no NaN/Inf; keep the clamp if editing the eps.
    inv = jnp.where(first,
                    jax.lax.rsqrt(jnp.maximum(n1, 1e-24)),
                    jax.lax.rsqrt(jnp.maximum(n2, 1e-24)))
    en = e * inv                                              # [e1n | e2n], (tb, 2*smaller)
    # x_sum = e1n + e2n: one in-vreg lane shift on the small 2*smaller-wide array.
    x_sum = en[:, :smaller] + en[:, smaller:]                 # (tb, smaller)

    # fc1 as a SINGLE K = d1+d2+smaller MXU push over the fused operand.
    fused = jnp.concatenate([x, x_sum], axis=-1).astype(jnp.bfloat16)
    h = jnp.dot(fused, w1_ref[...], preferred_element_type=jnp.float32) + b1_ref[...]
    h = jnp.maximum(h, 0.0)
    # TODO(synk): nn.Dropout(0.5) / nn.Dropout(0.3) are identity in eval mode.
    h = jnp.maximum(jnp.dot(h.astype(jnp.bfloat16), w2_ref[...],
                            preferred_element_type=jnp.float32) + b2_ref[...], 0.0)
    out_ref[...] = (jnp.dot(h.astype(jnp.bfloat16), w3_ref[...],
                            preferred_element_type=jnp.float32)
                    + b3_ref[...]).astype(out_ref.dtype)


def init_params(key, embed_dim1, embed_dim2, num_classes):
    """Deterministic parameter init (PyTorch weight convention: (out, in))."""
    smaller = min(embed_dim1, embed_dim2)
    larger = max(embed_dim1, embed_dim2)
    input_dim = embed_dim1 + embed_dim2 + smaller

    keys = jax.random.split(key, 10)

    def lin(kw, kb, out_d, in_d):
        scale = 1.0 / jnp.sqrt(in_d)
        w = jax.random.uniform(kw, (out_d, in_d), jnp.float32, -scale, scale)
        b = jax.random.uniform(kb, (out_d,), jnp.float32, -scale, scale)
        return w, b

    params = {}
    params["decrease_w"], params["decrease_b"] = lin(keys[0], keys[1], smaller, larger)
    params["smaller_w"], params["smaller_b"] = lin(keys[2], keys[3], smaller, smaller)
    params["fc1_w"], params["fc1_b"] = lin(keys[4], keys[5], 1024, input_dim)
    params["fc2_w"], params["fc2_b"] = lin(keys[6], keys[7], 256, 1024)
    params["fc3_w"], params["fc3_b"] = lin(keys[8], keys[9], num_classes, 256)
    return params


def prepare_params(params, embed_dim1, embed_dim2):
    """One-time canonicalization:
       * block-diagonal embedding weight (d1+d2, 2*smaller) in f32,
       * fc1/fc2/fc3 transposed to (in, out) and cast to bf16,
       * fc3 zero-padded to a lane-dense 128 output columns,
       * biases kept in f32 rows of shape (1, N)."""
    d1, d2 = embed_dim1, embed_dim2
    s = min(d1, d2)
    num_classes = params["fc3_w"].shape[0]
    ncp = _round_up(num_classes, 128)

    wemb = jnp.zeros((d1 + d2, 2 * s), jnp.float32)
    if d1 > d2:
        # x1 (larger) -> decrease_embed, x2 -> smaller_embed
        wemb = wemb.at[:d1, :s].set(params["decrease_w"].T)
        wemb = wemb.at[d1:, s:].set(params["smaller_w"].T)
        bemb = jnp.concatenate([params["decrease_b"], params["smaller_b"]])
    else:
        # x1 -> smaller_embed, x2 -> decrease_embed
        wemb = wemb.at[:d1, :s].set(params["smaller_w"].T)
        wemb = wemb.at[d1:, s:].set(params["decrease_w"].T)
        bemb = jnp.concatenate([params["smaller_b"], params["decrease_b"]])
    bemb = bemb.reshape(1, -1).astype(jnp.float32)

    # fc1 weight already has input order [x1 | x2 | x_sum] -> single fused matrix.
    w1 = params["fc1_w"].T.astype(jnp.bfloat16)               # (d1+d2+s, 1024)
    b1 = params["fc1_b"].reshape(1, -1).astype(jnp.float32)
    w2 = params["fc2_w"].T.astype(jnp.bfloat16)                # (1024, 256)
    b2 = params["fc2_b"].reshape(1, -1).astype(jnp.float32)
    w3 = jnp.zeros((params["fc3_w"].shape[1], ncp), jnp.float32)
    w3 = w3.at[:, :num_classes].set(params["fc3_w"].T).astype(jnp.bfloat16)
    b3 = jnp.zeros((1, ncp), jnp.float32).at[:, :num_classes].set(params["fc3_b"])

    weights = (wemb, bemb, w1, b1, w2, b2, w3, b3)
    return {"weights": weights, "num_classes": num_classes,
            "padded_classes": ncp, "smaller": s}


def _pick_tile(batch, block_b):
    """Batch tile: multiple of 16 sublanes (bf16 intermediates); cap at block_b;
    when the batch is big enough, split so the parallel grid has >= 2 steps so
    both v7x TensorCores get work (harmless single-core on v5e/v6e)."""
    full = _round_up(batch, 16)
    tb = min(block_b, full)
    if full > 16:
        tb = min(tb, _round_up((full + 1) // 2, 16))
    padded = _round_up(batch, tb)
    return tb, padded


def two_embedding_sum_residual(prep, x1, x2, *, block_b=512, out_dtype=jnp.float32):
    B, d1 = x1.shape
    _, d2 = x2.shape
    s = prep["smaller"]
    num_classes = prep["num_classes"]
    ncp = prep["padded_classes"]
    weights = prep["weights"]
    din = d1 + d2

    # Inputs stream in f32 (embedding-path fidelity); the bf16 cast for the fc
    # stack happens inside the kernel after the embedding matmul.
    x_cat = jnp.concatenate([x1, x2], axis=-1).astype(jnp.float32)

    tb, Bp = _pick_tile(B, block_b)
    if Bp != B:
        x_cat = jnp.pad(x_cat, ((0, Bp - B), (0, 0)))
    nb = Bp // tb

    # Activations tiled over the batch grid; weight index_maps always return
    # block 0 so they stay VMEM-resident across grid iterations (no re-DMA).
    in_specs = [pl.BlockSpec((tb, din), lambda i: (i, 0))]
    in_specs += [pl.BlockSpec(w.shape, lambda i: (0, 0)) for w in weights]
    out_spec = pl.BlockSpec((tb, ncp), lambda i: (i, 0))

    flops = 2 * Bp * (din * 2 * s + (din + s) * 1024 + 1024 * 256 + 256 * ncp)
    wbytes = sum(int(w.size) * w.dtype.itemsize for w in weights)
    cost = pl.CostEstimate(
        flops=int(flops),
        transcendentals=int(2 * Bp),
        bytes_accessed=int(wbytes + x_cat.size * 4
                           + Bp * ncp * jnp.dtype(out_dtype).itemsize),
    )

    out = pl.pallas_call(
        functools.partial(_fused_kernel, smaller=s),
        out_shape=jax.ShapeDtypeStruct((Bp, ncp), out_dtype),
        grid=(nb,),
        in_specs=in_specs,
        out_specs=out_spec,
        compiler_params=pltpu.CompilerParams(dimension_semantics=("parallel",)),
        cost_estimate=cost,
    )(x_cat, *weights)
    # TODO(synk): for v5e-bound deployments pass out_dtype=jnp.bfloat16 and let the
    # caller consume the padded (Bp, ncp) array to halve the output HBM stream and
    # skip this re-slice; f32 + exact shape kept here as the safe default.
    return out[:B, :num_classes]


def reference(params, x1, x2):
    """Pure-JAX f32 reference mirroring the PyTorch forward (eval mode)."""
    d1, d2 = x1.shape[1], x2.shape[1]
    if d1 > d2:
        x1n = _l2norm(x1 @ params["decrease_w"].T + params["decrease_b"])
        x2n = _l2norm(x2 @ params["smaller_w"].T + params["smaller_b"])
    else:
        x2n = _l2norm(x2 @ params["decrease_w"].T + params["decrease_b"])
        x1n = _l2norm(x1 @ params["smaller_w"].T + params["smaller_b"])
    x_sum = x1n + x2n
    fusion = jnp.concatenate([x1, x2, x_sum], axis=-1)
    h = jnp.maximum(fusion @ params["fc1_w"].T + params["fc1_b"], 0.0)
    h = jnp.maximum(h @ params["fc2_w"].T + params["fc2_b"], 0.0)
    return h @ params["fc3_w"].T + params["fc3_b"]


if __name__ == "__main__":
    B, D1, D2, NUM_CLASSES = 8, 48, 32, 10

    key = jax.random.PRNGKey(0)
    k_p, k_x1, k_x2 = jax.random.split(key, 3)

    params = init_params(k_p, D1, D2, NUM_CLASSES)
    prep = prepare_params(params, D1, D2)      # one-time weight canonicalization
    x1 = jax.random.normal(k_x1, (B, D1), jnp.float32)
    x2 = jax.random.normal(k_x2, (B, D2), jnp.float32)

    out = two_embedding_sum_residual(prep, x1, x2)
    out = jax.block_until_ready(out)

    ref = reference(params, x1, x2)
    assert out.shape == (B, NUM_CLASSES)
    # bf16 matmul operands for fc1/fc2/fc3 (f32 accumulation, f32 embedding path)
    # vs the pure-f32 reference.
    assert jnp.allclose(out, ref, rtol=5e-2, atol=5e-2), "mismatch vs reference"

    print("KERNEL_OK")
</pallas_src>

<mosaic_0001>
module attributes {stable_mosaic.version = 11 : i64} {
  func.func @_fused_kernel(%arg0: i32, %arg1: memref<16x80xf32, #tpu.memory_space<vmem>>, %arg2: memref<80x64xf32, #tpu.memory_space<vmem>>, %arg3: memref<1x64xf32, #tpu.memory_space<vmem>>, %arg4: memref<112x1024xbf16, #tpu.memory_space<vmem>>, %arg5: memref<1x1024xf32, #tpu.memory_space<vmem>>, %arg6: memref<1024x256xbf16, #tpu.memory_space<vmem>>, %arg7: memref<1x256xf32, #tpu.memory_space<vmem>>, %arg8: memref<256x128xbf16, #tpu.memory_space<vmem>>, %arg9: memref<1x128xf32, #tpu.memory_space<vmem>>, %arg10: memref<16x128xf32, #tpu.memory_space<vmem>>) attributes {dimension_semantics = [#tpu.dimension_semantics<parallel>], iteration_bounds = array<i64: 1>, scalar_prefetch = 0 : i64, scratch_operands = 0 : i64, tpu.core_type = #tpu.core_type<tc>, window_params = [{transform_indices = @transform_0, window_bounds = array<i64: 16, 80>}, {pipeline_mode = #tpu.pipeline_mode<synchronous>, transform_indices = @transform_1, window_bounds = array<i64: 80, 64>}, {pipeline_mode = #tpu.pipeline_mode<synchronous>, transform_indices = @transform_2, window_bounds = array<i64: 1, 64>}, {pipeline_mode = #tpu.pipeline_mode<synchronous>, transform_indices = @transform_3, window_bounds = array<i64: 112, 1024>}, {pipeline_mode = #tpu.pipeline_mode<synchronous>, transform_indices = @transform_4, window_bounds = array<i64: 1, 1024>}, {pipeline_mode = #tpu.pipeline_mode<synchronous>, transform_indices = @transform_5, window_bounds = array<i64: 1024, 256>}, {pipeline_mode = #tpu.pipeline_mode<synchronous>, transform_indices = @transform_6, window_bounds = array<i64: 1, 256>}, {pipeline_mode = #tpu.pipeline_mode<synchronous>, transform_indices = @transform_7, window_bounds = array<i64: 256, 128>}, {pipeline_mode = #tpu.pipeline_mode<synchronous>, transform_indices = @transform_8, window_bounds = array<i64: 1, 128>}, {transform_indices = @transform_9, window_bounds = array<i64: 16, 128>}]} {
    %c0 = arith.constant 0 : index
    %c0_0 = arith.constant 0 : index
    %0 = vector.load %arg1[%c0, %c0_0] : memref<16x80xf32, #tpu.memory_space<vmem>>, vector<16x80xf32>
    %c0_1 = arith.constant 0 : index
    %c0_2 = arith.constant 0 : index
    %1 = vector.load %arg2[%c0_1, %c0_2] : memref<80x64xf32, #tpu.memory_space<vmem>>, vector<80x64xf32>
    %cst = arith.constant dense<0.000000e+00> : vector<16x64xf32>
    %2 = tpu.matmul %0, %1, %cst {dimension_numbers = #tpu.dot_dimension_numbers<[1], [0], [0], [1], [0, 0, 1, 1], [], []>} : vector<16x80xf32>, vector<80x64xf32>, vector<16x64xf32> -> vector<16x64xf32>
    %c0_3 = arith.constant 0 : index
    %c0_4 = arith.constant 0 : index
    %3 = vector.load %arg3[%c0_3, %c0_4] : memref<1x64xf32, #tpu.memory_space<vmem>>, vector<1x64xf32>
    %4 = vector.broadcast %3 : vector<1x64xf32> to vector<16x64xf32>
    %5 = arith.addf %2, %4 : vector<16x64xf32>
    %6 = tpu.iota {dimensions = array<i32: 1>} : vector<16x64xi32>
    %c32_i32 = arith.constant 32 : i32
    %7 = vector.broadcast %c32_i32 : i32 to vector<16x64xi32>
    %8 = arith.cmpi slt, %6, %7 : vector<16x64xi32>
    %9 = arith.mulf %5, %5 : vector<16x64xf32>
    %cst_5 = arith.constant 0.000000e+00 : f32
    %10 = vector.broadcast %cst_5 : f32 to vector<16x64xf32>
    %11 = arith.select %8, %9, %10 : vector<16x64xi1>, vector<16x64xf32>
    %cst_6 = arith.constant dense<0.000000e+00> : vector<16xf32>
    %12 = vector.multi_reduction <add>, %11, %cst_6 [1] : vector<16x64xf32> to vector<16xf32>
    %13 = vector.shape_cast %12 : vector<16xf32> to vector<16x1xf32>
    %cst_7 = arith.constant dense<0.000000e+00> : vector<16xf32>
    %14 = vector.multi_reduction <add>, %9, %cst_7 [1] : vector<16x64xf32> to vector<16xf32>
    %15 = vector.shape_cast %14 : vector<16xf32> to vector<16x1xf32>
    %16 = arith.subf %15, %13 : vector<16x1xf32>
    %cst_8 = arith.constant 1.000000e-24 : f32
    %17 = vector.broadcast %cst_8 : f32 to vector<16x1xf32>
    %18 = arith.maximumf %13, %17 : vector<16x1xf32>
    %19 = math.rsqrt %18 : vector<16x1xf32>
    %cst_9 = arith.constant 1.000000e-24 : f32
    %20 = vector.broadcast %cst_9 : f32 to vector<16x1xf32>
    %21 = arith.maximumf %16, %20 : vector<16x1xf32>
    %22 = math.rsqrt %21 : vector<16x1xf32>
    %23 = vector.shape_cast %19 : vector<16x1xf32> to vector<16x1xf32>
    %24 = vector.broadcast %23 : vector<16x1xf32> to vector<16x64xf32>
    %25 = vector.shape_cast %22 : vector<16x1xf32> to vector<16x1xf32>
    %26 = vector.broadcast %25 : vector<16x1xf32> to vector<16x64xf32>
    %27 = arith.select %8, %24, %26 : vector<16x64xi1>, vector<16x64xf32>
    %28 = arith.mulf %5, %27 : vector<16x64xf32>
    %29 = vector.extract_strided_slice %28 {offsets = [0, 0], sizes = [16, 32], strides = [1, 1]} : vector<16x64xf32> to vector<16x32xf32>
    %30 = vector.extract_strided_slice %28 {offsets = [0, 32], sizes = [16, 32], strides = [1, 1]} : vector<16x64xf32> to vector<16x32xf32>
    %31 = arith.addf %29, %30 : vector<16x32xf32>
    %32 = tpu.concatenate %0, %31 in 1 : vector<16x80xf32>, vector<16x32xf32> -> vector<16x112xf32>
    %33 = arith.truncf %32 : vector<16x112xf32> to vector<16x112xbf16>
    %c0_10 = arith.constant 0 : index
    %c0_11 = arith.constant 0 : index
    %34 = vector.load %arg4[%c0_10, %c0_11] : memref<112x1024xbf16, #tpu.memory_space<vmem>>, vector<112x1024xbf16>
    %cst_12 = arith.constant dense<0.000000e+00> : vector<16x1024xf32>
    %35 = tpu.matmul %33, %34, %cst_12 {dimension_numbers = #tpu.dot_dimension_numbers<[1], [0], [0], [1], [0, 0, 1, 1], [], []>} : vector<16x112xbf16>, vector<112x1024xbf16>, vector<16x1024xf32> -> vector<16x1024xf32>
    %c0_13 = arith.constant 0 : index
    %c0_14 = arith.constant 0 : index
    %36 = vector.load %arg5[%c0_13, %c0_14] : memref<1x1024xf32, #tpu.memory_space<vmem>>, vector<1x1024xf32>
    %37 = vector.broadcast %36 : vector<1x1024xf32> to vector<16x1024xf32>
    %38 = arith.addf %35, %37 : vector<16x1024xf32>
    %cst_15 = arith.constant 0.000000e+00 : f32
    %39 = vector.broadcast %cst_15 : f32 to vector<16x1024xf32>
    %40 = arith.maximumf %38, %39 : vector<16x1024xf32>
    %41 = arith.truncf %40 : vector<16x1024xf32> to vector<16x1024xbf16>
    %c0_16 = arith.constant 0 : index
    %c0_17 = arith.constant 0 : index
    %42 = vector.load %arg6[%c0_16, %c0_17] : memref<1024x256xbf16, #tpu.memory_space<vmem>>, vector<1024x256xbf16>
    %cst_18 = arith.constant dense<0.000000e+00> : vector<16x256xf32>
    %43 = tpu.matmul %41, %42, %cst_18 {dimension_numbers = #tpu.dot_dimension_numbers<[1], [0], [0], [1], [0, 0, 1, 1], [], []>} : vector<16x1024xbf16>, vector<1024x256xbf16>, vector<16x256xf32> -> vector<16x256xf32>
    %c0_19 = arith.constant 0 : index
    %c0_20 = arith.constant 0 : index
    %44 = vector.load %arg7[%c0_19, %c0_20] : memref<1x256xf32, #tpu.memory_space<vmem>>, vector<1x256xf32>
    %45 = vector.broadcast %44 : vector<1x256xf32> to vector<16x256xf32>
    %46 = arith.addf %43, %45 : vector<16x256xf32>
    %cst_21 = arith.constant 0.000000e+00 : f32
    %47 = vector.broadcast %cst_21 : f32 to vector<16x256xf32>
    %48 = arith.maximumf %46, %47 : vector<16x256xf32>
    %49 = arith.truncf %48 : vector<16x256xf32> to vector<16x256xbf16>
    %c0_22 = arith.constant 0 : index
    %c0_23 = arith.constant 0 : index
    %50 = vector.load %arg8[%c0_22, %c0_23] : memref<256x128xbf16, #tpu.memory_space<vmem>>, vector<256x128xbf16>
    %cst_24 = arith.constant dense<0.000000e+00> : vector<16x128xf32>
    %51 = tpu.matmul %49, %50, %cst_24 {dimension_numbers = #tpu.dot_dimension_numbers<[1], [0], [0], [1], [0, 0, 1, 1], [], []>} : vector<16x256xbf16>, vector<256x128xbf16>, vector<16x128xf32> -> vector<16x128xf32>
    %c0_25 = arith.constant 0 : index
    %c0_26 = arith.constant 0 : index
    %52 = vector.load %arg9[%c0_25, %c0_26] : memref<1x128xf32, #tpu.memory_space<vmem>>, vector<1x128xf32>
    %53 = vector.broadcast %52 : vector<1x128xf32> to vector<16x128xf32>
    %54 = arith.addf %51, %53 : vector<16x128xf32>
    %c0_27 = arith.constant 0 : index
    %c0_28 = arith.constant 0 : index
    %55 = vector.load %arg10[%c0_27, %c0_28] : memref<16x128xf32, #tpu.memory_space<vmem>>, vector<16x128xf32>
    tpu.vector_store %arg10[%c0_27, %c0_28], %54 {strides = array<i32>} : memref<16x128xf32, #tpu.memory_space<vmem>>, vector<16x128xf32>,
    return
  }
  func.func @transform_0(%arg0: i32) -> (i32, i32) {
    %c0_i32 = arith.constant 0 : i32
    %c0_i32_0 = arith.constant 0 : i32
    return %arg0, %c0_i32 : i32, i32
  }
  func.func @transform_1(%arg0: i32) -> (i32, i32) {
    %c0_i32 = arith.constant 0 : i32
    %c0_i32_0 = arith.constant 0 : i32
    %c0_i32_1 = arith.constant 0 : i32
    return %c0_i32, %c0_i32_0 : i32, i32
  }
  func.func @transform_2(%arg0: i32) -> (i32, i32) {
    %c0_i32 = arith.constant 0 : i32
    %c0_i32_0 = arith.constant 0 : i32
    %c0_i32_1 = arith.constant 0 : i32
    return %c0_i32, %c0_i32_0 : i32, i32
  }
  func.func @transform_3(%arg0: i32) -> (i32, i32) {
    %c0_i32 = arith.constant 0 : i32
    %c0_i32_0 = arith.constant 0 : i32
    %c0_i32_1 = arith.constant 0 : i32
    return %c0_i32, %c0_i32_0 : i32, i32
  }
  func.func @transform_4(%arg0: i32) -> (i32, i32) {
    %c0_i32 = arith.constant 0 : i32
    %c0_i32_0 = arith.constant 0 : i32
    %c0_i32_1 = arith.constant 0 : i32
    return %c0_i32, %c0_i32_0 : i32, i32
  }
  func.func @transform_5(%arg0: i32) -> (i32, i32) {
    %c0_i32 = arith.constant 0 : i32
    %c0_i32_0 = arith.constant 0 : i32
    %c0_i32_1 = arith.constant 0 : i32
    return %c0_i32, %c0_i32_0 : i32, i32
  }
  func.func @transform_6(%arg0: i32) -> (i32, i32) {
    %c0_i32 = arith.constant 0 : i32
    %c0_i32_0 = arith.constant 0 : i32
    %c0_i32_1 = arith.constant 0 : i32
    return %c0_i32, %c0_i32_0 : i32, i32
  }
  func.func @transform_7(%arg0: i32) -> (i32, i32) {
    %c0_i32 = arith.constant 0 : i32
    %c0_i32_0 = arith.constant 0 : i32
    %c0_i32_1 = arith.constant 0 : i32
    return %c0_i32, %c0_i32_0 : i32, i32
  }
  func.func @transform_8(%arg0: i32) -> (i32, i32) {
    %c0_i32 = arith.constant 0 : i32
    %c0_i32_0 = arith.constant 0 : i32
    %c0_i32_1 = arith.constant 0 : i32
    return %c0_i32, %c0_i32_0 : i32, i32
  }
  func.func @transform_9(%arg0: i32) -> (i32, i32) {
    %c0_i32 = arith.constant 0 : i32
    %c0_i32_0 = arith.constant 0 : i32
    return %arg0, %c0_i32 : i32, i32
  }
}

</mosaic_0001>

<llo_original>
// kernel: tpu_custom_call.1
$region0: #{tpu_custom_call.1}
  #allocation0 [shape = 'u32[]', space=smem, size = 0x4, offset = 0x4, fixed_abs, tag = 'smem constant byte address 0x4 - core index']
  #allocation1 [shape = 'u32[144,128]{1,0:T(1,128)}', space=vmem, size = 0x12000, scoped, tag = 'internal scratch']
  %s0 = inlined_call_operand.vmem [shape: f32[16,80], index: 0, kind: input, shape index: {}]
  %s1 = inlined_call_operand.vmem [shape: f32[80,64], index: 1, kind: input, shape index: {}]
  %s2 = inlined_call_operand.vmem [shape: f32[1,64], index: 2, kind: input, shape index: {}]
  %s3 = inlined_call_operand.hbm [shape: bf16[112,1024], index: 3, kind: input, shape index: {}]
  %s4 = inlined_call_operand.vmem [shape: f32[1,1024], index: 4, kind: input, shape index: {}]
  %s5 = inlined_call_operand.hbm [shape: bf16[1024,256], index: 5, kind: input, shape index: {}]
  %s6 = inlined_call_operand.vmem [shape: f32[1,256], index: 6, kind: input, shape index: {}]
  %s7 = inlined_call_operand.vmem [shape: bf16[256,128], index: 7, kind: input, shape index: {}]
  %s8 = inlined_call_operand.vmem [shape: f32[1,128], index: 8, kind: input, shape index: {}]
  %s9 = inlined_call_operand.hbm [shape: f32[16,128], index: 9, kind: output, shape index: {}]
  %s10 = sld [smem:[#allocation0]]
  $region54: #{tpu_custom_call.1} parent=0
    _
  %s12 = ssub.s32 1, %s10
  %s13 = scalar_select 0, %s12, %s10
  $region1: #{tpu_custom_call.1} parent=0
    #allocation2 [shape = 'u8[229376]{0}', space=vmem, size = 0x38000, scoped, tag = 'input window, operand 3, single buffered']
    #allocation3 [shape = 's32[1]{0}', space=sflag, size = 0x4, scoped, tag = 'scoped memory for tpu_custom_call.1']
    #allocation4 [shape = 's32[1]{0}', space=sflag, size = 0x4, scoped, tag = 'scoped memory for tpu_custom_call.1']
    #allocation5 [shape = 'u8[524288]{0}', space=vmem, size = 0x80000, scoped, tag = 'input window, operand 5, single buffered']
    #allocation6 [shape = 's32[1]{0}', space=sflag, size = 0x4, scoped, tag = 'scoped memory for tpu_custom_call.1']
    #allocation7 [shape = 'u8[8192]{0}', space=vmem, size = 0x2000, scoped, tag = 'output window, operand 0, single buffered']
    %14 = vsyncpa [#allocation3], 0
    %15 = vsyncpa [#allocation6], 0
    %16 = vsyncpa [#allocation4], 0
    // Predicated region
    $region2: #{tpu_custom_call.1} parent=1 // pred_check
      _
    $region3: #{tpu_custom_call.1} parent=1 // pred_check_branch
      %18 = sbr.rel (0) target = $region5
    $region4: #{tpu_custom_call.1} parent=1 // pred_region
      _
    $region5: #{tpu_custom_call.1} parent=1 // pred_fallthru
      _
    // Predicated region
    $region6: #{tpu_custom_call.1} parent=1 // pred_check
      _
    $region7: #{tpu_custom_call.1} parent=1 // pred_check_branch
      %20 = sbr.rel (0) target = $region9
    $region8: #{tpu_custom_call.1} parent=1 // pred_region
      _
    $region9: #{tpu_custom_call.1} parent=1 // pred_fallthru
      _
    // Predicated region
    $region10: #{tpu_custom_call.1} parent=1 // pred_check
      _
    $region11: #{tpu_custom_call.1} parent=1 // pred_check_branch
      %22 = sbr.rel (0) target = $region13
    $region12: #{tpu_custom_call.1} parent=1 // pred_region
      _
    $region13: #{tpu_custom_call.1} parent=1 // pred_fallthru
      _
    // Predicated region
    $region14: #{tpu_custom_call.1} parent=1 // pred_check
      _
    $region15: #{tpu_custom_call.1} parent=1 // pred_check_branch
      %24 = sbr.rel (0) target = $region17
    $region16: #{tpu_custom_call.1} parent=1 // pred_region
      %s26 = ssub.s32 7168, 7168
      %27 = vsyncadd [#allocation3], %s26
      %s28 = sshll.u32 [#allocation2], 4
      %s29 = int_to_ptr.vmem [resolvable:$true] %s28
      %34 = dma.hbm_to_vmem [thread:$0]  %s3, 7168, %s29, [#allocation3], 512, 512, 32
    $region17: #{tpu_custom_call.1} parent=1 // pred_fallthru
      _
    // Predicated region
    $region18: #{tpu_custom_call.1} parent=1 // pred_check
      _
    $region19: #{tpu_custom_call.1} parent=1 // pred_check_branch
      %36 = sbr.rel (0) target = $region21
    $region20: #{tpu_custom_call.1} parent=1 // pred_region
      _
    $region21: #{tpu_custom_call.1} parent=1 // pred_fallthru
      _
    // Predicated region
    $region22: #{tpu_custom_call.1} parent=1 // pred_check
      _
    $region23: #{tpu_custom_call.1} parent=1 // pred_check_branch
      %38 = sbr.rel (0) target = $region25
    $region24: #{tpu_custom_call.1} parent=1 // pred_region
      %s40 = ssub.s32 16384, 16384
      %41 = vsyncadd [#allocation6], %s40
      %s42 = sshll.u32 [#allocation5], 4
      %s43 = int_to_ptr.vmem [resolvable:$true] %s42
      %48 = dma.hbm_to_vmem [thread:$0]  %s5, 16384, %s43, [#allocation6], 128, 128, 8
    $region25: #{tpu_custom_call.1} parent=1 // pred_fallthru
      _
    // Predicated region
    $region26: #{tpu_custom_call.1} parent=1 // pred_check
      _
    $region27: #{tpu_custom_call.1} parent=1 // pred_check_branch
      %50 = sbr.rel (0) target = $region29
    $region28: #{tpu_custom_call.1} parent=1 // pred_region
      _
    $region29: #{tpu_custom_call.1} parent=1 // pred_fallthru
      _
    // Predicated region
    $region30: #{tpu_custom_call.1} parent=1 // pred_check
      _
    $region31: #{tpu_custom_call.1} parent=1 // pred_check_branch
      %52 = sbr.rel (0) target = $region33
    $region32: #{tpu_custom_call.1} parent=1 // pred_region
      _
    $region33: #{tpu_custom_call.1} parent=1 // pred_fallthru
      _
    // Predicated region
    $region34: #{tpu_custom_call.1} parent=1 // pred_check
      _
    $region35: #{tpu_custom_call.1} parent=1 // pred_check_branch
      %54 = sbr.rel (0) target = $region37
    $region36: #{tpu_custom_call.1} parent=1 // pred_region
      _
    $region37: #{tpu_custom_call.1} parent=1 // pred_fallthru
      _
    // Predicated region
    $region38: #{tpu_custom_call.1} parent=1 // pred_check
      _
    $region39: #{tpu_custom_call.1} parent=1 // pred_check_branch
      %56 = sbr.rel (0) target = $region41
    $region40: #{tpu_custom_call.1} parent=1 // pred_region
      %57 = dma.done [#allocation3], 7168
    $region41: #{tpu_custom_call.1} parent=1 // pred_fallthru
      _
    // Predicated region
    $region42: #{tpu_custom_call.1} parent=1 // pred_check
      _
    $region43: #{tpu_custom_call.1} parent=1 // pred_check_branch
      %59 = sbr.rel (0) target = $region45
    $region44: #{tpu_custom_call.1} parent=1 // pred_region
      %60 = dma.done [#allocation6], 16384
    $region45: #{tpu_custom_call.1} parent=1 // pred_fallthru
      _
    %v62 = vld [vmem:[%s0] sm:$0xff]
    %v63 = vld [vmem:[%s0 + $0x8] sm:$0xff]
    %v64 = vld [vmem:[%s1] sm:$0xff]
    %v65 = vld [vmem:[%s1 + $0x8] sm:$0xff]
    %v66 = vld [vmem:[%s1 + $0x10] sm:$0xff]
    %v67 = vld [vmem:[%s1 + $0x18] sm:$0xff]
    %v68 = vld [vmem:[%s1 + $0x20] sm:$0xff]
    %v69 = vld [vmem:[%s1 + $0x28] sm:$0xff]
    %v70 = vld [vmem:[%s1 + $0x30] sm:$0xff]
    %v71 = vld [vmem:[%s1 + $0x38] sm:$0xff]
    %v72 = vld [vmem:[%s1 + $0x40] sm:$0xff]
    %v73 = vld [vmem:[%s1 + $0x48] sm:$0xff]
    %v74 = vld [vmem:[%s2] sm:$0x1]
    %v76 = vlaneseq
    %v77 = vshrl.u32 %v76, 7
    %v78 = vsub.s32 0, %v77
    %v79 = vrot.slane %v74, %v78
    %vm81 = vcmask 654336
    %v83 = vsel %vm81, %v62, 0
    %v86 = vsel %vm81, %v63, 0
    %88 = vmatprep.subr.mxu0 0.0
    %89 = vmatpush1.msra.mxu0 %v64
    %90 = vmatprep.subr.mxu0 0.0
    %91 = vmatpush1.msra.mxu0 %v65
    %92 = vmatprep.subr.mxu0 0.0
    %93 = vmatpush1.msra.mxu0 %v66
    %94 = vmatprep.subr.mxu0 0.0
    %95 = vmatpush1.msra.mxu0 %v67
    %96 = vmatprep.subr.mxu0 0.0
    %97 = vmatpush1.msra.mxu0 %v68
    %98 = vmatprep.subr.mxu0 0.0
    %99 = vmatpush1.msra.mxu0 %v69
    %100 = vmatprep.subr.mxu0 0.0
    %101 = vmatpush1.msra.mxu0 %v70
    %102 = vmatprep.subr.mxu0 0.0
    %103 = vmatpush1.msra.mxu0 %v71
    %104 = vmatprep.subr.mxu0 0.0
    %105 = vmatpush1.msra.mxu0 %v72
    %106 = vmatprep.subr.mxu0 0.0
    %107 = vmatpush1.msra.mxu0 %v73
    %108 = vmatprep.subr.mxu0 0.0
    %109 = vmatpush1.msra.mxu0 0.0
    %110 = vmatprep.subr.mxu0 0.0
    %111 = vmatpush1.msra.mxu0 0.0
    %112 = vmatprep.subr.mxu0 0.0
    %113 = vmatpush1.msra.mxu0 0.0
    %114 = vmatprep.subr.mxu0 0.0
    %115 = vmatpush1.msra.mxu0 0.0
    %116 = vmatprep.subr.mxu0 0.0
    %117 = vmatpush1.msra.mxu0 0.0
    %118 = vmatprep.subr.mxu0 0.0
    %119 = vmatpush1.msra.mxu0 0.0
    %120 = vmatprep.subr.mxu0 0.0
    %121 = vmatpush1.msra.mxu0 0.0
    %122 = vmatprep.subr.mxu0 0.0
    %123 = vmatpush1.msra.mxu0 0.0
    %124 = vmatprep.subr.mxu0 0.0
    %125 = vmatpush1.msra.mxu0 0.0
    %126 = vmatprep.subr.mxu0 0.0
    %127 = vmatpush1.msra.mxu0 0.0
    %128 = vmatprep.subr.mxu0 0.0
    %129 = vmatpush1.msra.mxu0 0.0
    %130 = vmatprep.subr.mxu0 0.0
    %131 = vmatpush1.msra.mxu0 0.0
    %132 = vmatprep.subr.mxu0 0.0
    %133 = vmatpush1.msra.mxu0 0.0
    %134 = vmatprep.subr.mxu0 0.0
    %135 = vmatpush1.msra.mxu0 0.0
    %136 = vmatprep.subr.mxu0 0.0
    %137 = vmatpush1.msra.mxu0 0.0
    %138 = vmatprep.subr.mxu0 0.0
    %139 = vmatpush1.msra.mxu0 0.0
    %140 = vmatprep.subr.mxu0 0.0
    %141 = vmatpush1.msra.mxu0 0.0
    %142 = vmatprep.subr.mxu0 0.0
    %143 = vmatpush1.msra.mxu0 0.0
    %144 = vmatprep.subr.mxu0 0.0
    %145 = vmatpush1.msra.mxu0 0.0
    %146 = vmatprep.subr.mxu0 0.0
    %147 = vmatpush1.msra.mxu0 0.0
    %148 = vmatprep.subr.mxu0 0.0
    %149 = vmatpush1.msra.mxu0 0.0
    %150 = vmatprep.subr.mxu0 0.0
    %151 = vmatpush1.msra.mxu0 0.0
    %152 = vmatprep.mubr.f32.mxu0 0.0
    %153 = vmatmul.mubr.f32.gmra.mrb[0].mxu0 %v83
    %v154 = vpop.f32.mrb[0].mxu0
    %v155 = vadd.f32 %v79, %v154
    %v156 = vpop.f32.mrb[0].mxu0
    %157 = vmatprep.mubr.f32.mxu0 0.0
    %158 = vmatmul.mubr.f32.gmra.mrb[0].mxu0 %v86
    %v159 = vpop.f32.mrb[0].mxu0
    %v160 = vadd.f32 %v79, %v159
    %v161 = vpop.f32.mrb[0].mxu0
    %162 = vdwg.mxu0
    %v163 = vlaneseq
    %v164 = vand.u32 %v163, 127
    %vm165 = vcmp.lt.s32.totalorder %v164, 32
    %v166 = vmul.f32 %v155, %v155
    %v167 = vmul.f32 %v160, %v160
    %v168 = vsel %vm165, %v166, 0.0
    %v169 = vsel %vm165, %v167, 0.0
    %vm170 = vcmask 523264
    %v171 = vsel %vm170, %v168, 0.0
    %172 = vadd.xlane.f32.xlu0 %v171
    %v173 = vpop.xlane.xlu0 %172
    %v174 = vsel %vm170, %v169, 0.0
    %175 = vadd.xlane.f32.xlu0 %v174
    %v176 = vpop.xlane.xlu0 %175
    %v177 = vsel %vm170, %v166, 0.0
    %178 = vadd.xlane.f32.xlu0 %v177
    %v179 = vpop.xlane.xlu0 %178
    %v180 = vsel %vm170, %v167, 0.0
    %181 = vadd.xlane.f32.xlu0 %v180
    %v182 = vpop.xlane.xlu0 %181
    %v183 = vsub.f32 %v179, %v173
    %v184 = vsub.f32 %v182, %v176
    %v185 = vmax.f32 %v173, 1e-24
    %v186 = vmax.f32 %v176, 1e-24
    %v187 = vrsqrt.pop %v185
    %v188 = vrsqrt.pop %v186
    %v189 = vmax.f32 %v183, 1e-24
    %v190 = vmax.f32 %v184, 1e-24
    %v191 = vrsqrt.pop %v189
    %v192 = vrsqrt.pop %v190
    %v193 = vsel %vm165, %v187, %v191
    %v194 = vsel %vm165, %v188, %v192
    %v195 = vmul.f32 %v155, %v193
    %v196 = vmul.f32 %v160, %v194
    %199 = vrot.lane.b32.xlu0 %v195, 96
    %v200 = vpop.permute.xlu0 %199
    %201 = vrot.lane.b32.xlu0 %v196, 96
    %v202 = vpop.permute.xlu0 %201
    %v205 = vadd.f32 %v195, %v200
    %v206 = vadd.f32 %v196, %v202
    %209 = vrot.lane.b32.xlu0 %v205, 80
    %v210 = vpop.permute.xlu0 %209
    %211 = vrot.lane.b32.xlu0 %v206, 80
    %v212 = vpop.permute.xlu0 %211
    %v215 = vsel %vm81, %v62, %v210
    %v216 = vsel %vm81, %v63, %v212
    %v217 = vpack.c.bf16 %v216, %v215
    %v218 = vld [vmem:[#allocation2] sm:$0xff]
    %v219 = vld [vmem:[#allocation2 + $0x8] sm:$0xff]
    %v220 = vld [vmem:[#allocation2 + $0x10] sm:$0xff]
    %v221 = vld [vmem:[#allocation2 + $0x18] sm:$0xff]
    %v222 = vld [vmem:[#allocation2 + $0x20] sm:$0xff]
    %v223 = vld [vmem:[#allocation2 + $0x28] sm:$0xff]
    %v224 = vld [vmem:[#allocation2 + $0x30] sm:$0xff]
    %v225 = vld [vmem:[#allocation2 + $0x38] sm:$0xff]
    %v226 = vld [vmem:[#allocation2 + $0x40] sm:$0xff]
    %v227 = vld [vmem:[#allocation2 + $0x48] sm:$0xff]
    %v228 = vld [vmem:[#allocation2 + $0x50] sm:$0xff]
    %v229 = vld [vmem:[#allocation2 + $0x58] sm:$0xff]
    %v230 = vld [vmem:[#allocation2 + $0x60] sm:$0xff]
    %v231 = vld [vmem:[#allocation2 + $0x68] sm:$0xff]
    %v232 = vld [vmem:[#allocation2 + $0x70] sm:$0xff]
    %v233 = vld [vmem:[#allocation2 + $0x78] sm:$0xff]
    %v234 = vld [vmem:[#allocation2 + $0x80] sm:$0xff]
    %v235 = vld [vmem:[#allocation2 + $0x88] sm:$0xff]
    %v236 = vld [vmem:[#allocation2 + $0x90] sm:$0xff]
    %v237 = vld [vmem:[#allocation2 + $0x98] sm:$0xff]
    %v238 = vld [vmem:[#allocation2 + $0xa0] sm:$0xff]
    %v239 = vld [vmem:[#allocation2 + $0xa8] sm:$0xff]
    %v240 = vld [vmem:[#allocation2 + $0xb0] sm:$0xff]
    %v241 = vld [vmem:[#allocation2 + $0xb8] sm:$0xff]
    %v242 = vld [vmem:[#allocation2 + $0xc0] sm:$0xff]
    %v243 = vld [vmem:[#allocation2 + $0xc8] sm:$0xff]
    %v244 = vld [vmem:[#allocation2 + $0xd0] sm:$0xff]
    %v245 = vld [vmem:[#allocation2 + $0xd8] sm:$0xff]
    %v246 = vld [vmem:[#allocation2 + $0xe0] sm:$0xff]
    %v247 = vld [vmem:[#allocation2 + $0xe8] sm:$0xff]
    %v248 = vld [vmem:[#allocation2 + $0xf0] sm:$0xff]
    %v249 = vld [vmem:[#allocation2 + $0xf8] sm:$0xff]
    %v250 = vld [vmem:[#allocation2 + $0x100] sm:$0xff]
    %v251 = vld [vmem:[#allocation2 + $0x108] sm:$0xff]
    %v252 = vld [vmem:[#allocation2 + $0x110] sm:$0xff]
    %v253 = vld [vmem:[#allocation2 + $0x118] sm:$0xff]
    %v254 = vld [vmem:[#allocation2 + $0x120] sm:$0xff]
    %v255 = vld [vmem:[#allocation2 + $0x128] sm:$0xff]
    %v256 = vld [vmem:[#allocation2 + $0x130] sm:$0xff]
    %v257 = vld [vmem:[#allocation2 + $0x138] sm:$0xff]
    %v258 = vld [vmem:[#allocation2 + $0x140] sm:$0xff]
    %v259 = vld [vmem:[#allocation2 + $0x148] sm:$0xff]
    %v260 = vld [vmem:[#allocation2 + $0x150] sm:$0xff]
    %v261 = vld [vmem:[#allocation2 + $0x158] sm:$0xff]
    %v262 = vld [vmem:[#allocation2 + $0x160] sm:$0xff]
    %v263 = vld [vmem:[#allocation2 + $0x168] sm:$0xff]
    %v264 = vld [vmem:[#allocation2 + $0x170] sm:$0xff]
    %v265 = vld [vmem:[#allocation2 + $0x178] sm:$0xff]
    %v266 = vld [vmem:[#allocation2 + $0x180] sm:$0xff]
    %v267 = vld [vmem:[#allocation2 + $0x188] sm:$0xff]
    %v268 = vld [vmem:[#allocation2 + $0x190] sm:$0xff]
    %v269 = vld [vmem:[#allocation2 + $0x198] sm:$0xff]
    %v270 = vld [vmem:[#allocation2 + $0x1a0] sm:$0xff]
    %v271 = vld [vmem:[#allocation2 + $0x1a8] sm:$0xff]
    %v272 = vld [vmem:[#allocation2 + $0x1b0] sm:$0xff]
    %v273 = vld [vmem:[#allocation2 + $0x1b8] sm:$0xff]
    %v274 = vld [vmem:[%s4] sm:$0xff]
    %v276 = vlaneseq
    %v277 = vshrl.u32 %v276, 7
    %v278 = vsub.s32 0, %v277
    %v279 = vrot.slane %v274, %v278
    %v280 = vlaneseq
    %v281 = vshrl.u32 %v280, 7
    %v282 = vsub.s32 1, %v281
    %v283 = vrot.slane %v274, %v282
    %v284 = vlaneseq
    %v285 = vshrl.u32 %v284, 7
    %v286 = vsub.s32 2, %v285
    %v287 = vrot.slane %v274, %v286
    %v288 = vlaneseq
    %v289 = vshrl.u32 %v288, 7
    %v290 = vsub.s32 3, %v289
    %v291 = vrot.slane %v274, %v290
    %v292 = vlaneseq
    %v293 = vshrl.u32 %v292, 7
    %v294 = vsub.s32 4, %v293
    %v295 = vrot.slane %v274, %v294
    %v296 = vlaneseq
    %v297 = vshrl.u32 %v296, 7
    %v298 = vsub.s32 5, %v297
    %v299 = vrot.slane %v274, %v298
    %v300 = vlaneseq
    %v301 = vshrl.u32 %v300, 7
    %v302 = vsub.s32 6, %v301
    %v303 = vrot.slane %v274, %v302
    %v304 = vlaneseq
    %v305 = vshrl.u32 %v304, 7
    %v306 = vsub.s32 7, %v305
    %v307 = vrot.slane %v274, %v306
    %v372 = vunpack.c.l.b16 %v218
    %v373 = vunpack.c.h.b16 %v218
    %v374 = vunpack.c.l.b16 %v219
    %v375 = vunpack.c.h.b16 %v219
    %v376 = vunpack.c.l.b16 %v220
    %v377 = vunpack.c.h.b16 %v220
    %v378 = vunpack.c.l.b16 %v221
    %v379 = vunpack.c.h.b16 %v221
    %v380 = vunpack.c.l.b16 %v222
    %v381 = vunpack.c.h.b16 %v222
    %v382 = vunpack.c.l.b16 %v223
    %v383 = vunpack.c.h.b16 %v223
    %v384 = vunpack.c.l.b16 %v224
    %v385 = vunpack.c.h.b16 %v224
    %v386 = vunpack.c.l.b16 %v225
    %v387 = vunpack.c.h.b16 %v225
    %v388 = vunpack.c.l.b16 %v226
    %v389 = vunpack.c.h.b16 %v226
    %v390 = vunpack.c.l.b16 %v227
    %v391 = vunpack.c.h.b16 %v227
    %v392 = vunpack.c.l.b16 %v228
    %v393 = vunpack.c.h.b16 %v228
    %v394 = vunpack.c.l.b16 %v229
    %v395 = vunpack.c.h.b16 %v229
    %v396 = vunpack.c.l.b16 %v230
    %v397 = vunpack.c.h.b16 %v230
    %v398 = vunpack.c.l.b16 %v231
    %v399 = vunpack.c.h.b16 %v231
    %v400 = vunpack.c.l.b16 %v232
    %v401 = vunpack.c.h.b16 %v232
    %v402 = vunpack.c.l.b16 %v233
    %v403 = vunpack.c.h.b16 %v233
    %v404 = vunpack.c.l.b16 %v234
    %v405 = vunpack.c.h.b16 %v234
    %v406 = vunpack.c.l.b16 %v235
    %v407 = vunpack.c.h.b16 %v235
    %v408 = vunpack.c.l.b16 %v236
    %v409 = vunpack.c.h.b16 %v236
    %v410 = vunpack.c.l.b16 %v237
    %v411 = vunpack.c.h.b16 %v237
    %v412 = vunpack.c.l.b16 %v238
    %v413 = vunpack.c.h.b16 %v238
    %v414 = vunpack.c.l.b16 %v239
    %v415 = vunpack.c.h.b16 %v239
    %v416 = vunpack.c.l.b16 %v240
    %v417 = vunpack.c.h.b16 %v240
    %v418 = vunpack.c.l.b16 %v241
    %v419 = vunpack.c.h.b16 %v241
    %v420 = vunpack.c.l.b16 %v242
    %v421 = vunpack.c.h.b16 %v242
    %v422 = vunpack.c.l.b16 %v243
    %v423 = vunpack.c.h.b16 %v243
    %v424 = vunpack.c.l.b16 %v244
    %v425 = vunpack.c.h.b16 %v244
    %v426 = vunpack.c.l.b16 %v245
    %v427 = vunpack.c.h.b16 %v245
    %v428 = vunpack.c.l.b16 %v246
    %v429 = vunpack.c.h.b16 %v246
    %v430 = vunpack.c.l.b16 %v247
    %v431 = vunpack.c.h.b16 %v247
    %v432 = vunpack.c.l.b16 %v248
    %v433 = vunpack.c.h.b16 %v248
    %v434 = vunpack.c.l.b16 %v249
    %v435 = vunpack.c.h.b16 %v249
    %v436 = vunpack.c.l.b16 %v250
    %v437 = vunpack.c.h.b16 %v250
    %v438 = vunpack.c.l.b16 %v251
    %v439 = vunpack.c.h.b16 %v251
    %v440 = vunpack.c.l.b16 %v252
    %v441 = vunpack.c.h.b16 %v252
    %v442 = vunpack.c.l.b16 %v253
    %v443 = vunpack.c.h.b16 %v253
    %v444 = vunpack.c.l.b16 %v254
    %v445 = vunpack.c.h.b16 %v254
    %v446 = vunpack.c.l.b16 %v255
    %v447 = vunpack.c.h.b16 %v255
    %v448 = vunpack.c.l.b16 %v256
    %v449 = vunpack.c.h.b16 %v256
    %v450 = vunpack.c.l.b16 %v257
    %v451 = vunpack.c.h.b16 %v257
    %v452 = vunpack.c.l.b16 %v258
    %v453 = vunpack.c.h.b16 %v258
    %v454 = vunpack.c.l.b16 %v259
    %v455 = vunpack.c.h.b16 %v259
    %v456 = vunpack.c.l.b16 %v260
    %v457 = vunpack.c.h.b16 %v260
    %v458 = vunpack.c.l.b16 %v261
    %v459 = vunpack.c.h.b16 %v261
    %v460 = vunpack.c.l.b16 %v262
    %v461 = vunpack.c.h.b16 %v262
    %v462 = vunpack.c.l.b16 %v263
    %v463 = vunpack.c.h.b16 %v263
    %v464 = vunpack.c.l.b16 %v264
    %v465 = vunpack.c.h.b16 %v264
    %v466 = vunpack.c.l.b16 %v265
    %v467 = vunpack.c.h.b16 %v265
    %v468 = vunpack.c.l.b16 %v266
    %v469 = vunpack.c.h.b16 %v266
    %v470 = vunpack.c.l.b16 %v267
    %v471 = vunpack.c.h.b16 %v267
    %v472 = vunpack.c.l.b16 %v268
    %v473 = vunpack.c.h.b16 %v268
    %v474 = vunpack.c.l.b16 %v269
    %v475 = vunpack.c.h.b16 %v269
    %v476 = vunpack.c.l.b16 %v270
    %v477 = vunpack.c.h.b16 %v270
    %v478 = vunpack.c.l.b16 %v271
    %v479 = vunpack.c.h.b16 %v271
    %v480 = vunpack.c.l.b16 %v272
    %v481 = vunpack.c.h.b16 %v272
    %v482 = vunpack.c.l.b16 %v273
    %v483 = vunpack.c.h.b16 %v273
    %v484 = vpack.c.b16 %v380, %v372
    %v485 = vpack.c.b16 %v381, %v373
    %v486 = vpack.c.b16 %v382, %v374
    %v487 = vpack.c.b16 %v383, %v375
    %v488 = vpack.c.b16 %v384, %v376
    %v489 = vpack.c.b16 %v385, %v377
    %v490 = vpack.c.b16 %v386, %v378
    %v491 = vpack.c.b16 %v387, %v379
    %v492 = vpack.c.b16 %v396, %v388
    %v493 = vpack.c.b16 %v397, %v389
    %v494 = vpack.c.b16 %v398, %v390
    %v495 = vpack.c.b16 %v399, %v391
    %v496 = vpack.c.b16 %v400, %v392
    %v497 = vpack.c.b16 %v401, %v393
    %v498 = vpack.c.b16 %v402, %v394
    %v499 = vpack.c.b16 %v403, %v395
    %v500 = vpack.c.b16 %v412, %v404
    %v501 = vpack.c.b16 %v413, %v405
    %v502 = vpack.c.b16 %v414, %v406
    %v503 = vpack.c.b16 %v415, %v407
    %v504 = vpack.c.b16 %v416, %v408
    %v505 = vpack.c.b16 %v417, %v409
    %v506 = vpack.c.b16 %v418, %v410
    %v507 = vpack.c.b16 %v419, %v411
    %v508 = vpack.c.b16 %v428, %v420
    %v509 = vpack.c.b16 %v429, %v421
    %v510 = vpack.c.b16 %v430, %v422
    %v511 = vpack.c.b16 %v431, %v423
    %v512 = vpack.c.b16 %v432, %v424
    %v513 = vpack.c.b16 %v433, %v425
    %v514 = vpack.c.b16 %v434, %v426
    %v515 = vpack.c.b16 %v435, %v427
    %v516 = vpack.c.b16 %v444, %v436
    %v517 = vpack.c.b16 %v445, %v437
    %v518 = vpack.c.b16 %v446, %v438
    %v519 = vpack.c.b16 %v447, %v439
    %v520 = vpack.c.b16 %v448, %v440
    %v521 = vpack.c.b16 %v449, %v441
    %v522 = vpack.c.b16 %v450, %v442
    %v523 = vpack.c.b16 %v451, %v443
    %v524 = vpack.c.b16 %v460, %v452
    %v525 = vpack.c.b16 %v461, %v453
    %v526 = vpack.c.b16 %v462, %v454
    %v527 = vpack.c.b16 %v463, %v455
    %v528 = vpack.c.b16 %v464, %v456
    %v529 = vpack.c.b16 %v465, %v457
    %v530 = vpack.c.b16 %v466, %v458
    %v531 = vpack.c.b16 %v467, %v459
    %v532 = vpack.c.b16 %v476, %v468
    %v533 = vpack.c.b16 %v477, %v469
    %v534 = vpack.c.b16 %v478, %v470
    %v535 = vpack.c.b16 %v479, %v471
    %v536 = vpack.c.b16 %v480, %v472
    %v537 = vpack.c.b16 %v481, %v473
    %v538 = vpack.c.b16 %v482, %v474
    %v539 = vpack.c.b16 %v483, %v475
    %vm596 = vcmask 916480
    %v598 = vsel %vm596, %v217, 0
    %600 = vmatprep.subr.bf16.mxu0 %v485
    %601 = vmatpush1.bf16.msra.mxu0 %v484
    %602 = vmatprep.subr.bf16.mxu0 %v493
    %603 = vmatpush1.bf16.msra.mxu0 %v492
    %604 = vmatprep.subr.bf16.mxu0 %v501
    %605 = vmatpush1.bf16.msra.mxu0 %v500
    %606 = vmatprep.subr.bf16.mxu0 %v509
    %607 = vmatpush1.bf16.msra.mxu0 %v508
    %608 = vmatprep.subr.bf16.mxu0 %v517
    %609 = vmatpush1.bf16.msra.mxu0 %v516
    %610 = vmatprep.subr.bf16.mxu0 %v525
    %611 = vmatpush1.bf16.msra.mxu0 %v524
    %612 = vmatprep.subr.bf16.mxu0 %v533
    %613 = vmatpush1.bf16.msra.mxu0 %v532
    %614 = vmatprep.subr.bf16.mxu0 0
    %615 = vmatpush1.bf16.msra.mxu0 0
    %616 = vmatprep.subr.bf16.mxu0 0
    %617 = vmatpush1.bf16.msra.mxu0 0
    %618 = vmatprep.subr.bf16.mxu0 0
    %619 = vmatpush1.bf16.msra.mxu0 0
    %620 = vmatprep.subr.bf16.mxu0 0
    %621 = vmatpush1.bf16.msra.mxu0 0
    %622 = vmatprep.subr.bf16.mxu0 0
    %623 = vmatpush1.bf16.msra.mxu0 0
    %624 = vmatprep.subr.bf16.mxu0 0
    %625 = vmatpush1.bf16.msra.mxu0 0
    %626 = vmatprep.subr.bf16.mxu0 0
    %627 = vmatpush1.bf16.msra.mxu0 0
    %628 = vmatprep.subr.bf16.mxu0 0
    %629 = vmatpush1.bf16.msra.mxu0 0
    %630 = vmatprep.subr.bf16.mxu0 0
    %631 = vmatpush1.bf16.msra.mxu0 0
    %632 = vmatprep.mubr.bf16.mxu0 0
    %633 = vmatmul.mubr.bf16.gmra.mrb[0].mxu0 %v598
    %v634 = vpop.f32.mrb[0].mxu0
    %v635 = vadd.f32 %v279, %v634
    %v636 = vpop.f32.mrb[0].mxu0
    %v637 = vadd.f32 %v283, %v636
    %v638 = vpop.f32.mrb[0].mxu0
    %v639 = vadd.f32 %v279, %v638
    %v640 = vpop.f32.mrb[0].mxu0
    %v641 = vadd.f32 %v283, %v640
    %642 = vdwg.mxu0
    %643 = vmatprep.subr.bf16.mxu0 %v487
    %644 = vmatpush1.bf16.msra.mxu0 %v486
    %645 = vmatprep.subr.bf16.mxu0 %v495
    %646 = vmatpush1.bf16.msra.mxu0 %v494
    %647 = vmatprep.subr.bf16.mxu0 %v503
    %648 = vmatpush1.bf16.msra.mxu0 %v502
    %649 = vmatprep.subr.bf16.mxu0 %v511
    %650 = vmatpush1.bf16.msra.mxu0 %v510
    %651 = vmatprep.subr.bf16.mxu0 %v519
    %652 = vmatpush1.bf16.msra.mxu0 %v518
    %653 = vmatprep.subr.bf16.mxu0 %v527
    %654 = vmatpush1.bf16.msra.mxu0 %v526
    %655 = vmatprep.subr.bf16.mxu0 %v535
    %656 = vmatpush1.bf16.msra.mxu0 %v534
    %657 = vmatprep.subr.bf16.mxu0 0
    %658 = vmatpush1.bf16.msra.mxu0 0
    %659 = vmatprep.subr.bf16.mxu0 0
    %660 = vmatpush1.bf16.msra.mxu0 0
    %661 = vmatprep.subr.bf16.mxu0 0
    %662 = vmatpush1.bf16.msra.mxu0 0
    %663 = vmatprep.subr.bf16.mxu0 0
    %664 = vmatpush1.bf16.msra.mxu0 0
    %665 = vmatprep.subr.bf16.mxu0 0
    %666 = vmatpush1.bf16.msra.mxu0 0
    %667 = vmatprep.subr.bf16.mxu0 0
    %668 = vmatpush1.bf16.msra.mxu0 0
    %669 = vmatprep.subr.bf16.mxu0 0
    %670 = vmatpush1.bf16.msra.mxu0 0
    %671 = vmatprep.subr.bf16.mxu0 0
    %672 = vmatpush1.bf16.msra.mxu0 0
    %673 = vmatprep.subr.bf16.mxu0 0
    %674 = vmatpush1.bf16.msra.mxu0 0
    %675 = vmatprep.mubr.bf16.mxu0 0
    %676 = vmatmul.mubr.bf16.gmra.mrb[0].mxu0 %v598
    %v677 = vpop.f32.mrb[0].mxu0
    %v678 = vadd.f32 %v287, %v677
    %v679 = vpop.f32.mrb[0].mxu0
    %v680 = vadd.f32 %v291, %v679
    %v681 = vpop.f32.mrb[0].mxu0
    %v682 = vadd.f32 %v287, %v681
    %v683 = vpop.f32.mrb[0].mxu0
    %v684 = vadd.f32 %v291, %v683
    %685 = vdwg.mxu0
    %686 = vmatprep.subr.bf16.mxu0 %v489
    %687 = vmatpush1.bf16.msra.mxu0 %v488
    %688 = vmatprep.subr.bf16.mxu0 %v497
    %689 = vmatpush1.bf16.msra.mxu0 %v496
    %690 = vmatprep.subr.bf16.mxu0 %v505
    %691 = vmatpush1.bf16.msra.mxu0 %v504
    %692 = vmatprep.subr.bf16.mxu0 %v513
    %693 = vmatpush1.bf16.msra.mxu0 %v512
    %694 = vmatprep.subr.bf16.mxu0 %v521
    %695 = vmatpush1.bf16.msra.mxu0 %v520
    %696 = vmatprep.subr.bf16.mxu0 %v529
    %697 = vmatpush1.bf16.msra.mxu0 %v528
    %698 = vmatprep.subr.bf16.mxu0 %v537
    %699 = vmatpush1.bf16.msra.mxu0 %v536
    %700 = vmatprep.subr.bf16.mxu0 0
    %701 = vmatpush1.bf16.msra.mxu0 0
    %702 = vmatprep.subr.bf16.mxu0 0
    %703 = vmatpush1.bf16.msra.mxu0 0
    %704 = vmatprep.subr.bf16.mxu0 0
    %705 = vmatpush1.bf16.msra.mxu0 0
    %706 = vmatprep.subr.bf16.mxu0 0
    %707 = vmatpush1.bf16.msra.mxu0 0
    %708 = vmatprep.subr.bf16.mxu0 0
    %709 = vmatpush1.bf16.msra.mxu0 0
    %710 = vmatprep.subr.bf16.mxu0 0
    %711 = vmatpush1.bf16.msra.mxu0 0
    %712 = vmatprep.subr.bf16.mxu0 0
    %713 = vmatpush1.bf16.msra.mxu0 0
    %714 = vmatprep.subr.bf16.mxu0 0
    %715 = vmatpush1.bf16.msra.mxu0 0
    %716 = vmatprep.subr.bf16.mxu0 0
    %717 = vmatpush1.bf16.msra.mxu0 0
    %718 = vmatprep.mubr.bf16.mxu0 0
    %719 = vmatmul.mubr.bf16.gmra.mrb[0].mxu0 %v598
    %v720 = vpop.f32.mrb[0].mxu0
    %v721 = vadd.f32 %v295, %v720
    %v722 = vpop.f32.mrb[0].mxu0
    %v723 = vadd.f32 %v299, %v722
    %v724 = vpop.f32.mrb[0].mxu0
    %v725 = vadd.f32 %v295, %v724
    %v726 = vpop.f32.mrb[0].mxu0
    %v727 = vadd.f32 %v299, %v726
    %728 = vdwg.mxu0
    %729 = vmatprep.subr.bf16.mxu0 %v491
    %730 = vmatpush1.bf16.msra.mxu0 %v490
    %731 = vmatprep.subr.bf16.mxu0 %v499
    %732 = vmatpush1.bf16.msra.mxu0 %v498
    %733 = vmatprep.subr.bf16.mxu0 %v507
    %734 = vmatpush1.bf16.msra.mxu0 %v506
    %735 = vmatprep.subr.bf16.mxu0 %v515
    %736 = vmatpush1.bf16.msra.mxu0 %v514
    %737 = vmatprep.subr.bf16.mxu0 %v523
    %738 = vmatpush1.bf16.msra.mxu0 %v522
    %739 = vmatprep.subr.bf16.mxu0 %v531
    %740 = vmatpush1.bf16.msra.mxu0 %v530
    %741 = vmatprep.subr.bf16.mxu0 %v539
    %742 = vmatpush1.bf16.msra.mxu0 %v538
    %743 = vmatprep.subr.bf16.mxu0 0
    %744 = vmatpush1.bf16.msra.mxu0 0
    %745 = vmatprep.subr.bf16.mxu0 0
    %746 = vmatpush1.bf16.msra.mxu0 0
    %747 = vmatprep.subr.bf16.mxu0 0
    %748 = vmatpush1.bf16.msra.mxu0 0
    %749 = vmatprep.subr.bf16.mxu0 0
    %750 = vmatpush1.bf16.msra.mxu0 0
    %751 = vmatprep.subr.bf16.mxu0 0
    %752 = vmatpush1.bf16.msra.mxu0 0
    %753 = vmatprep.subr.bf16.mxu0 0
    %754 = vmatpush1.bf16.msra.mxu0 0
    %755 = vmatprep.subr.bf16.mxu0 0
    %756 = vmatpush1.bf16.msra.mxu0 0
    %757 = vmatprep.subr.bf16.mxu0 0
    %758 = vmatpush1.bf16.msra.mxu0 0
    %759 = vmatprep.subr.bf16.mxu0 0
    %760 = vmatpush1.bf16.msra.mxu0 0
    %761 = vmatprep.mubr.bf16.mxu0 0
    %762 = vmatmul.mubr.bf16.gmra.mrb[0].mxu0 %v598
    %v763 = vpop.f32.mrb[0].mxu0
    %v764 = vadd.f32 %v303, %v763
    %v765 = vpop.f32.mrb[0].mxu0
    %v766 = vadd.f32 %v307, %v765
    %v767 = vpop.f32.mrb[0].mxu0
    %v768 = vadd.f32 %v303, %v767
    %v769 = vpop.f32.mrb[0].mxu0
    %v770 = vadd.f32 %v307, %v769
    %771 = vdwg.mxu0
    %v772 = vmax.f32 %v635, 0.0
    %v773 = vmax.f32 %v637, 0.0
    %v774 = vmax.f32 %v678, 0.0
    %v775 = vmax.f32 %v680, 0.0
    %v776 = vmax.f32 %v721, 0.0
    %v777 = vmax.f32 %v723, 0.0
    %v778 = vmax.f32 %v764, 0.0
    %v779 = vmax.f32 %v766, 0.0
    %v780 = vmax.f32 %v639, 0.0
    %v781 = vmax.f32 %v641, 0.0
    %v782 = vmax.f32 %v682, 0.0
    %v783 = vmax.f32 %v684, 0.0
    %v784 = vmax.f32 %v725, 0.0
    %v785 = vmax.f32 %v727, 0.0
    %v786 = vmax.f32 %v768, 0.0
    %v787 = vmax.f32 %v770, 0.0
    %v788 = vpack.c.bf16 %v780, %v772
    %v789 = vpack.c.bf16 %v781, %v773
    %v790 = vpack.c.bf16 %v782, %v774
    %v791 = vpack.c.bf16 %v783, %v775
    %v792 = vpack.c.bf16 %v784, %v776
    %v793 = vpack.c.bf16 %v785, %v777
    %v794 = vpack.c.bf16 %v786, %v778
    %v795 = vpack.c.bf16 %v787, %v779
    %v796 = vld [vmem:[#allocation5] sm:$0xff]
    %v797 = vld [vmem:[#allocation5 + $0x8] sm:$0xff]
    %v798 = vld [vmem:[#allocation5 + $0x10] sm:$0xff]
    %v799 = vld [vmem:[#allocation5 + $0x18] sm:$0xff]
    %v800 = vld [vmem:[#allocation5 + $0x20] sm:$0xff]
    %v801 = vld [vmem:[#allocation5 + $0x28] sm:$0xff]
    %v802 = vld [vmem:[#allocation5 + $0x30] sm:$0xff]
    %v803 = vld [vmem:[#allocation5 + $0x38] sm:$0xff]
    %v804 = vld [vmem:[#allocation5 + $0x40] sm:$0xff]
    %v805 = vld [vmem:[#allocation5 + $0x48] sm:$0xff]
    %v806 = vld [vmem:[#allocation5 + $0x50] sm:$0xff]
    %v807 = vld [vmem:[#allocation5 + $0x58] sm:$0xff]
    %v808 = vld [vmem:[#allocation5 + $0x60] sm:$0xff]
    %v809 = vld [vmem:[#allocation5 + $0x68] sm:$0xff]
    %v810 = vld [vmem:[#allocation5 + $0x70] sm:$0xff]
    %v811 = vld [vmem:[#allocation5 + $0x78] sm:$0xff]
    %v812 = vld [vmem:[#allocation5 + $0x80] sm:$0xff]
    %v813 = vld [vmem:[#allocation5 + $0x88] sm:$0xff]
    %v814 = vld [vmem:[#allocation5 + $0x90] sm:$0xff]
    %v815 = vld [vmem:[#allocation5 + $0x98] sm:$0xff]
    %v816 = vld [vmem:[#allocation5 + $0xa0] sm:$0xff]
    %v817 = vld [vmem:[#allocation5 + $0xa8] sm:$0xff]
    %v818 = vld [vmem:[#allocation5 + $0xb0] sm:$0xff]
    %v819 = vld [vmem:[#allocation5 + $0xb8] sm:$0xff]
    %v820 = vld [vmem:[#allocation5 + $0xc0] sm:$0xff]
    %v821 = vld [vmem:[#allocation5 + $0xc8] sm:$0xff]
    %v822 = vld [vmem:[#allocation5 + $0xd0] sm:$0xff]
    %v823 = vld [vmem:[#allocation5 + $0xd8] sm:$0xff]
    %v824 = vld [vmem:[#allocation5 + $0xe0] sm:$0xff]
    %v825 = vld [vmem:[#allocation5 + $0xe8] sm:$0xff]
    %v826 = vld [vmem:[#allocation5 + $0xf0] sm:$0xff]
    %v827 = vld [vmem:[#allocation5 + $0xf8] sm:$0xff]
    %v828 = vld [vmem:[#allocation5 + $0x100] sm:$0xff]
    %v829 = vld [vmem:[#allocation5 + $0x108] sm:$0xff]
    %v830 = vld [vmem:[#allocation5 + $0x110] sm:$0xff]
    %v831 = vld [vmem:[#allocation5 + $0x118] sm:$0xff]
    %v832 = vld [vmem:[#allocation5 + $0x120] sm:$0xff]
    %v833 = vld [vmem:[#allocation5 + $0x128] sm:$0xff]
    %v834 = vld [vmem:[#allocation5 + $0x130] sm:$0xff]
    %v835 = vld [vmem:[#allocation5 + $0x138] sm:$0xff]
    %v836 = vld [vmem:[#allocation5 + $0x140] sm:$0xff]
    %v837 = vld [vmem:[#allocation5 + $0x148] sm:$0xff]
    %v838 = vld [vmem:[#allocation5 + $0x150] sm:$0xff]
    %v839 = vld [vmem:[#allocation5 + $0x158] sm:$0xff]
    %v840 = vld [vmem:[#allocation5 + $0x160] sm:$0xff]
    %v841 = vld [vmem:[#allocation5 + $0x168] sm:$0xff]
    %v842 = vld [vmem:[#allocation5 + $0x170] sm:$0xff]
    %v843 = vld [vmem:[#allocation5 + $0x178] sm:$0xff]
    %v844 = vld [vmem:[#allocation5 + $0x180] sm:$0xff]
    %v845 = vld [vmem:[#allocation5 + $0x188] sm:$0xff]
    %v846 = vld [vmem:[#allocation5 + $0x190] sm:$0xff]
    %v847 = vld [vmem:[#allocation5 + $0x198] sm:$0xff]
    %v848 = vld [vmem:[#allocation5 + $0x1a0] sm:$0xff]
    %v849 = vld [vmem:[#allocation5 + $0x1a8] sm:$0xff]
    %v850 = vld [vmem:[#allocation5 + $0x1b0] sm:$0xff]
    %v851 = vld [vmem:[#allocation5 + $0x1b8] sm:$0xff]
    %v852 = vld [vmem:[#allocation5 + $0x1c0] sm:$0xff]
    %v853 = vld [vmem:[#allocation5 + $0x1c8] sm:$0xff]
    %v854 = vld [vmem:[#allocation5 + $0x1d0] sm:$0xff]
    %v855 = vld [vmem:[#allocation5 + $0x1d8] sm:$0xff]
    %v856 = vld [vmem:[#allocation5 + $0x1e0] sm:$0xff]
    %v857 = vld [vmem:[#allocation5 + $0x1e8] sm:$0xff]
    %v858 = vld [vmem:[#allocation5 + $0x1f0] sm:$0xff]
    %v859 = vld [vmem:[#allocation5 + $0x1f8] sm:$0xff]
    %v860 = vld [vmem:[#allocation5 + $0x200] sm:$0xff]
    %v861 = vld [vmem:[#allocation5 + $0x208] sm:$0xff]
    %v862 = vld [vmem:[#allocation5 + $0x210] sm:$0xff]
    %v863 = vld [vmem:[#allocation5 + $0x218] sm:$0xff]
    %v864 = vld [vmem:[#allocation5 + $0x220] sm:$0xff]
    %v865 = vld [vmem:[#allocation5 + $0x228] sm:$0xff]
    %v866 = vld [vmem:[#allocation5 + $0x230] sm:$0xff]
    %v867 = vld [vmem:[#allocation5 + $0x238] sm:$0xff]
    %v868 = vld [vmem:[#allocation5 + $0x240] sm:$0xff]
    %v869 = vld [vmem:[#allocation5 + $0x248] sm:$0xff]
    %v870 = vld [vmem:[#allocation5 + $0x250] sm:$0xff]
    %v871 = vld [vmem:[#allocation5 + $0x258] sm:$0xff]
    %v872 = vld [vmem:[#allocation5 + $0x260] sm:$0xff]
    %v873 = vld [vmem:[#allocation5 + $0x268] sm:$0xff]
    %v874 = vld [vmem:[#allocation5 + $0x270] sm:$0xff]
    %v875 = vld [vmem:[#allocation5 + $0x278] sm:$0xff]
    %v876 = vld [vmem:[#allocation5 + $0x280] sm:$0xff]
    %v877 = vld [vmem:[#allocation5 + $0x288] sm:$0xff]
    %v878 = vld [vmem:[#allocation5 + $0x290] sm:$0xff]
    %v879 = vld [vmem:[#allocation5 + $0x298] sm:$0xff]
    %v880 = vld [vmem:[#allocation5 + $0x2a0] sm:$0xff]
    %v881 = vld [vmem:[#allocation5 + $0x2a8] sm:$0xff]
    %v882 = vld [vmem:[#allocation5 + $0x2b0] sm:$0xff]
    %v883 = vld [vmem:[#allocation5 + $0x2b8] sm:$0xff]
    %v884 = vld [vmem:[#allocation5 + $0x2c0] sm:$0xff]
    %v885 = vld [vmem:[#allocation5 + $0x2c8] sm:$0xff]
    %v886 = vld [vmem:[#allocation5 + $0x2d0] sm:$0xff]
    %v887 = vld [vmem:[#allocation5 + $0x2d8] sm:$0xff]
    %v888 = vld [vmem:[#allocation5 + $0x2e0] sm:$0xff]
    %v889 = vld [vmem:[#allocation5 + $0x2e8] sm:$0xff]
    %v890 = vld [vmem:[#allocation5 + $0x2f0] sm:$0xff]
    %v891 = vld [vmem:[#allocation5 + $0x2f8] sm:$0xff]
    %v892 = vld [vmem:[#allocation5 + $0x300] sm:$0xff]
    %v893 = vld [vmem:[#allocation5 + $0x308] sm:$0xff]
    %v894 = vld [vmem:[#allocation5 + $0x310] sm:$0xff]
    %v895 = vld [vmem:[#allocation5 + $0x318] sm:$0xff]
    %v896 = vld [vmem:[#allocation5 + $0x320] sm:$0xff]
    %v897 = vld [vmem:[#allocation5 + $0x328] sm:$0xff]
    %v898 = vld [vmem:[#allocation5 + $0x330] sm:$0xff]
    %v899 = vld [vmem:[#allocation5 + $0x338] sm:$0xff]
    %v900 = vld [vmem:[#allocation5 + $0x340] sm:$0xff]
    %v901 = vld [vmem:[#allocation5 + $0x348] sm:$0xff]
    %v902 = vld [vmem:[#allocation5 + $0x350] sm:$0xff]
    %v903 = vld [vmem:[#allocation5 + $0x358] sm:$0xff]
    %v904 = vld [vmem:[#allocation5 + $0x360] sm:$0xff]
    %v905 = vld [vmem:[#allocation5 + $0x368] sm:$0xff]
    %v906 = vld [vmem:[#allocation5 + $0x370] sm:$0xff]
    %v907 = vld [vmem:[#allocation5 + $0x378] sm:$0xff]
    %v908 = vld [vmem:[#allocation5 + $0x380] sm:$0xff]
    %v909 = vld [vmem:[#allocation5 + $0x388] sm:$0xff]
    %v910 = vld [vmem:[#allocation5 + $0x390] sm:$0xff]
    %v911 = vld [vmem:[#allocation5 + $0x398] sm:$0xff]
    %v912 = vld [vmem:[#allocation5 + $0x3a0] sm:$0xff]
    %v913 = vld [vmem:[#allocation5 + $0x3a8] sm:$0xff]
    %v914 = vld [vmem:[#allocation5 + $0x3b0] sm:$0xff]
    %v915 = vld [vmem:[#allocation5 + $0x3b8] sm:$0xff]
    %v916 = vld [vmem:[#allocation5 + $0x3c0] sm:$0xff]
    %v917 = vld [vmem:[#allocation5 + $0x3c8] sm:$0xff]
    %v918 = vld [vmem:[#allocation5 + $0x3d0] sm:$0xff]
    %v919 = vld [vmem:[#allocation5 + $0x3d8] sm:$0xff]
    %v920 = vld [vmem:[#allocation5 + $0x3e0] sm:$0xff]
    %v921 = vld [vmem:[#allocation5 + $0x3e8] sm:$0xff]
    %v922 = vld [vmem:[#allocation5 + $0x3f0] sm:$0xff]
    %v923 = vld [vmem:[#allocation5 + $0x3f8] sm:$0xff]
    %v924 = vld [vmem:[%s6] sm:$0x3]
    %v926 = vlaneseq
    %v927 = vshrl.u32 %v926, 7
    %v928 = vsub.s32 0, %v927
    %v929 = vrot.slane %v924, %v928
    %v930 = vlaneseq
    %v931 = vshrl.u32 %v930, 7
    %v932 = vsub.s32 1, %v931
    %v933 = vrot.slane %v924, %v932
    %v1064 = vunpack.c.l.b16 %v796
    %v1065 = vunpack.c.h.b16 %v796
    %v1066 = vunpack.c.l.b16 %v797
    %v1067 = vunpack.c.h.b16 %v797
    %v1068 = vunpack.c.l.b16 %v798
    %v1069 = vunpack.c.h.b16 %v798
    %v1070 = vunpack.c.l.b16 %v799
    %v1071 = vunpack.c.h.b16 %v799
    %v1072 = vunpack.c.l.b16 %v800
    %v1073 = vunpack.c.h.b16 %v800
    %v1074 = vunpack.c.l.b16 %v801
    %v1075 = vunpack.c.h.b16 %v801
    %v1076 = vunpack.c.l.b16 %v802
    %v1077 = vunpack.c.h.b16 %v802
    %v1078 = vunpack.c.l.b16 %v803
    %v1079 = vunpack.c.h.b16 %v803
    %v1080 = vunpack.c.l.b16 %v804
    %v1081 = vunpack.c.h.b16 %v804
    %v1082 = vunpack.c.l.b16 %v805
    %v1083 = vunpack.c.h.b16 %v805
    %v1084 = vunpack.c.l.b16 %v806
    %v1085 = vunpack.c.h.b16 %v806
    %v1086 = vunpack.c.l.b16 %v807
    %v1087 = vunpack.c.h.b16 %v807
    %v1088 = vunpack.c.l.b16 %v808
    %v1089 = vunpack.c.h.b16 %v808
    %v1090 = vunpack.c.l.b16 %v809
    %v1091 = vunpack.c.h.b16 %v809
    %v1092 = vunpack.c.l.b16 %v810
    %v1093 = vunpack.c.h.b16 %v810
    %v1094 = vunpack.c.l.b16 %v811
    %v1095 = vunpack.c.h.b16 %v811
    %v1096 = vunpack.c.l.b16 %v812
    %v1097 = vunpack.c.h.b16 %v812
    %v1098 = vunpack.c.l.b16 %v813
    %v1099 = vunpack.c.h.b16 %v813
    %v1100 = vunpack.c.l.b16 %v814
    %v1101 = vunpack.c.h.b16 %v814
    %v1102 = vunpack.c.l.b16 %v815
    %v1103 = vunpack.c.h.b16 %v815
    %v1104 = vunpack.c.l.b16 %v816
    %v1105 = vunpack.c.h.b16 %v816
    %v1106 = vunpack.c.l.b16 %v817
    %v1107 = vunpack.c.h.b16 %v817
    %v1108 = vunpack.c.l.b16 %v818
    %v1109 = vunpack.c.h.b16 %v818
    %v1110 = vunpack.c.l.b16 %v819
    %v1111 = vunpack.c.h.b16 %v819
    %v1112 = vunpack.c.l.b16 %v820
    %v1113 = vunpack.c.h.b16 %v820
    %v1114 = vunpack.c.l.b16 %v821
    %v1115 = vunpack.c.h.b16 %v821
    %v1116 = vunpack.c.l.b16 %v822
    %v1117 = vunpack.c.h.b16 %v822
    %v1118 = vunpack.c.l.b16 %v823
    %v1119 = vunpack.c.h.b16 %v823
    %v1120 = vunpack.c.l.b16 %v824
    %v1121 = vunpack.c.h.b16 %v824
    %v1122 = vunpack.c.l.b16 %v825
    %v1123 = vunpack.c.h.b16 %v825
    %v1124 = vunpack.c.l.b16 %v826
    %v1125 = vunpack.c.h.b16 %v826
    %v1126 = vunpack.c.l.b16 %v827
    %v1127 = vunpack.c.h.b16 %v827
    %v1128 = vunpack.c.l.b16 %v828
    %v1129 = vunpack.c.h.b16 %v828
    %v1130 = vunpack.c.l.b16 %v829
    %v1131 = vunpack.c.h.b16 %v829
    %v1132 = vunpack.c.l.b16 %v830
    %v1133 = vunpack.c.h.b16 %v830
    %v1134 = vunpack.c.l.b16 %v831
    %v1135 = vunpack.c.h.b16 %v831
    %v1136 = vunpack.c.l.b16 %v832
    %v1137 = vunpack.c.h.b16 %v832
    %v1138 = vunpack.c.l.b16 %v833
    %v1139 = vunpack.c.h.b16 %v833
    %v1140 = vunpack.c.l.b16 %v834
    %v1141 = vunpack.c.h.b16 %v834
    %v1142 = vunpack.c.l.b16 %v835
    %v1143 = vunpack.c.h.b16 %v835
    %v1144 = vunpack.c.l.b16 %v836
    %v1145 = vunpack.c.h.b16 %v836
    %v1146 = vunpack.c.l.b16 %v837
    %v1147 = vunpack.c.h.b16 %v837
    %v1148 = vunpack.c.l.b16 %v838
    %v1149 = vunpack.c.h.b16 %v838
    %v1150 = vunpack.c.l.b16 %v839
    %v1151 = vunpack.c.h.b16 %v839
    %v1152 = vunpack.c.l.b16 %v840
    %v1153 = vunpack.c.h.b16 %v840
    %v1154 = vunpack.c.l.b16 %v841
    %v1155 = vunpack.c.h.b16 %v841
    %v1156 = vunpack.c.l.b16 %v842
    %v1157 = vunpack.c.h.b16 %v842
    %v1158 = vunpack.c.l.b16 %v843
    %v1159 = vunpack.c.h.b16 %v843
    %v1160 = vunpack.c.l.b16 %v844
    %v1161 = vunpack.c.h.b16 %v844
    %v1162 = vunpack.c.l.b16 %v845
    %v1163 = vunpack.c.h.b16 %v845
    %v1164 = vunpack.c.l.b16 %v846
    %v1165 = vunpack.c.h.b16 %v846
    %v1166 = vunpack.c.l.b16 %v847
    %v1167 = vunpack.c.h.b16 %v847
    %v1168 = vunpack.c.l.b16 %v848
    %v1169 = vunpack.c.h.b16 %v848
    %v1170 = vunpack.c.l.b16 %v849
    %v1171 = vunpack.c.h.b16 %v849
    %v1172 = vunpack.c.l.b16 %v850
    %v1173 = vunpack.c.h.b16 %v850
    %v1174 = vunpack.c.l.b16 %v851
    %v1175 = vunpack.c.h.b16 %v851
    %v1176 = vunpack.c.l.b16 %v852
    %v1177 = vunpack.c.h.b16 %v852
    %v1178 = vunpack.c.l.b16 %v853
    %v1179 = vunpack.c.h.b16 %v853
    %v1180 = vunpack.c.l.b16 %v854
    %v1181 = vunpack.c.h.b16 %v854
    %v1182 = vunpack.c.l.b16 %v855
    %v1183 = vunpack.c.h.b16 %v855
    %v1184 = vunpack.c.l.b16 %v856
    %v1185 = vunpack.c.h.b16 %v856
    %v1186 = vunpack.c.l.b16 %v857
    %v1187 = vunpack.c.h.b16 %v857
    %v1188 = vunpack.c.l.b16 %v858
    %v1189 = vunpack.c.h.b16 %v858
    %v1190 = vunpack.c.l.b16 %v859
    %v1191 = vunpack.c.h.b16 %v859
    %v1192 = vunpack.c.l.b16 %v860
    %v1193 = vunpack.c.h.b16 %v860
    %v1194 = vunpack.c.l.b16 %v861
    %v1195 = vunpack.c.h.b16 %v861
    %v1196 = vunpack.c.l.b16 %v862
    %v1197 = vunpack.c.h.b16 %v862
    %v1198 = vunpack.c.l.b16 %v863
    %v1199 = vunpack.c.h.b16 %v863
    %v1200 = vunpack.c.l.b16 %v864
    %v1201 = vunpack.c.h.b16 %v864
    %v1202 = vunpack.c.l.b16 %v865
    %v1203 = vunpack.c.h.b16 %v865
    %v1204 = vunpack.c.l.b16 %v866
    %v1205 = vunpack.c.h.b16 %v866
    %v1206 = vunpack.c.l.b16 %v867
    %v1207 = vunpack.c.h.b16 %v867
    %v1208 = vunpack.c.l.b16 %v868
    %v1209 = vunpack.c.h.b16 %v868
    %v1210 = vunpack.c.l.b16 %v869
    %v1211 = vunpack.c.h.b16 %v869
    %v1212 = vunpack.c.l.b16 %v870
    %v1213 = vunpack.c.h.b16 %v870
    %v1214 = vunpack.c.l.b16 %v871
    %v1215 = vunpack.c.h.b16 %v871
    %v1216 = vunpack.c.l.b16 %v872
    %v1217 = vunpack.c.h.b16 %v872
    %v1218 = vunpack.c.l.b16 %v873
    %v1219 = vunpack.c.h.b16 %v873
    %v1220 = vunpack.c.l.b16 %v874
    %v1221 = vunpack.c.h.b16 %v874
    %v1222 = vunpack.c.l.b16 %v875
    %v1223 = vunpack.c.h.b16 %v875
    %v1224 = vunpack.c.l.b16 %v876
    %v1225 = vunpack.c.h.b16 %v876
    %v1226 = vunpack.c.l.b16 %v877
    %v1227 = vunpack.c.h.b16 %v877
    %v1228 = vunpack.c.l.b16 %v878
    %v1229 = vunpack.c.h.b16 %v878
    %v1230 = vunpack.c.l.b16 %v879
    %v1231 = vunpack.c.h.b16 %v879
    %v1232 = vunpack.c.l.b16 %v880
    %v1233 = vunpack.c.h.b16 %v880
    %v1234 = vunpack.c.l.b16 %v881
    %v1235 = vunpack.c.h.b16 %v881
    %v1236 = vunpack.c.l.b16 %v882
    %v1237 = vunpack.c.h.b16 %v882
    %v1238 = vunpack.c.l.b16 %v883
    %v1239 = vunpack.c.h.b16 %v883
    %v1240 = vunpack.c.l.b16 %v884
    %v1241 = vunpack.c.h.b16 %v884
    %v1242 = vunpack.c.l.b16 %v885
    %v1243 = vunpack.c.h.b16 %v885
    %v1244 = vunpack.c.l.b16 %v886
    %v1245 = vunpack.c.h.b16 %v886
    %v1246 = vunpack.c.l.b16 %v887
    %v1247 = vunpack.c.h.b16 %v887
    %v1248 = vunpack.c.l.b16 %v888
    %v1249 = vunpack.c.h.b16 %v888
    %v1250 = vunpack.c.l.b16 %v889
    %v1251 = vunpack.c.h.b16 %v889
    %v1252 = vunpack.c.l.b16 %v890
    %v1253 = vunpack.c.h.b16 %v890
    %v1254 = vunpack.c.l.b16 %v891
    %v1255 = vunpack.c.h.b16 %v891
    %v1256 = vunpack.c.l.b16 %v892
    %v1257 = vunpack.c.h.b16 %v892
    %v1258 = vunpack.c.l.b16 %v893
    %v1259 = vunpack.c.h.b16 %v893
    %v1260 = vunpack.c.l.b16 %v894
    %v1261 = vunpack.c.h.b16 %v894
    %v1262 = vunpack.c.l.b16 %v895
    %v1263 = vunpack.c.h.b16 %v895
    %v1264 = vunpack.c.l.b16 %v896
    %v1265 = vunpack.c.h.b16 %v896
    %v1266 = vunpack.c.l.b16 %v897
    %v1267 = vunpack.c.h.b16 %v897
    %v1268 = vunpack.c.l.b16 %v898
    %v1269 = vunpack.c.h.b16 %v898
    %v1270 = vunpack.c.l.b16 %v899
    %v1271 = vunpack.c.h.b16 %v899
    %v1272 = vunpack.c.l.b16 %v900
    %v1273 = vunpack.c.h.b16 %v900
    %v1274 = vunpack.c.l.b16 %v901
    %v1275 = vunpack.c.h.b16 %v901
    %v1276 = vunpack.c.l.b16 %v902
    %v1277 = vunpack.c.h.b16 %v902
    %v1278 = vunpack.c.l.b16 %v903
    %v1279 = vunpack.c.h.b16 %v903
    %v1280 = vunpack.c.l.b16 %v904
    %v1281 = vunpack.c.h.b16 %v904
    %v1282 = vunpack.c.l.b16 %v905
    %v1283 = vunpack.c.h.b16 %v905
    %v1284 = vunpack.c.l.b16 %v906
    %v1285 = vunpack.c.h.b16 %v906
    %v1286 = vunpack.c.l.b16 %v907
    %v1287 = vunpack.c.h.b16 %v907
    %v1288 = vunpack.c.l.b16 %v908
    %v1289 = vunpack.c.h.b16 %v908
    %v1290 = vunpack.c.l.b16 %v909
    %v1291 = vunpack.c.h.b16 %v909
    %v1292 = vunpack.c.l.b16 %v910
    %v1293 = vunpack.c.h.b16 %v910
    %v1294 = vunpack.c.l.b16 %v911
    %v1295 = vunpack.c.h.b16 %v911
    %v1296 = vunpack.c.l.b16 %v912
    %v1297 = vunpack.c.h.b16 %v912
    %v1298 = vunpack.c.l.b16 %v913
    %v1299 = vunpack.c.h.b16 %v913
    %v1300 = vunpack.c.l.b16 %v914
    %v1301 = vunpack.c.h.b16 %v914
    %v1302 = vunpack.c.l.b16 %v915
    %v1303 = vunpack.c.h.b16 %v915
    %v1304 = vunpack.c.l.b16 %v916
    %v1305 = vunpack.c.h.b16 %v916
    %v1306 = vunpack.c.l.b16 %v917
    %v1307 = vunpack.c.h.b16 %v917
    %v1308 = vunpack.c.l.b16 %v918
    %v1309 = vunpack.c.h.b16 %v918
    %v1310 = vunpack.c.l.b16 %v919
    %v1311 = vunpack.c.h.b16 %v919
    %v1312 = vunpack.c.l.b16 %v920
    %v1313 = vunpack.c.h.b16 %v920
    %v1314 = vunpack.c.l.b16 %v921
    %v1315 = vunpack.c.h.b16 %v921
    %v1316 = vunpack.c.l.b16 %v922
    %v1317 = vunpack.c.h.b16 %v922
    %v1318 = vunpack.c.l.b16 %v923
    %v1319 = vunpack.c.h.b16 %v923
    %v1320 = vpack.c.b16 %v1066, %v1064
    %v1321 = vpack.c.b16 %v1067, %v1065
    %v1322 = vpack.c.b16 %v1070, %v1068
    %v1323 = vpack.c.b16 %v1071, %v1069
    %v1324 = vpack.c.b16 %v1074, %v1072
    %v1325 = vpack.c.b16 %v1075, %v1073
    %v1326 = vpack.c.b16 %v1078, %v1076
    %v1327 = vpack.c.b16 %v1079, %v1077
    %v1328 = vpack.c.b16 %v1082, %v1080
    %v1329 = vpack.c.b16 %v1083, %v1081
    %v1330 = vpack.c.b16 %v1086, %v1084
    %v1331 = vpack.c.b16 %v1087, %v1085
    %v1332 = vpack.c.b16 %v1090, %v1088
    %v1333 = vpack.c.b16 %v1091, %v1089
    %v1334 = vpack.c.b16 %v1094, %v1092
    %v1335 = vpack.c.b16 %v1095, %v1093
    %v1336 = vpack.c.b16 %v1098, %v1096
    %v1337 = vpack.c.b16 %v1099, %v1097
    %v1338 = vpack.c.b16 %v1102, %v1100
    %v1339 = vpack.c.b16 %v1103, %v1101
    %v1340 = vpack.c.b16 %v1106, %v1104
    %v1341 = vpack.c.b16 %v1107, %v1105
    %v1342 = vpack.c.b16 %v1110, %v1108
    %v1343 = vpack.c.b16 %v1111, %v1109
    %v1344 = vpack.c.b16 %v1114, %v1112
    %v1345 = vpack.c.b16 %v1115, %v1113
    %v1346 = vpack.c.b16 %v1118, %v1116
    %v1347 = vpack.c.b16 %v1119, %v1117
    %v1348 = vpack.c.b16 %v1122, %v1120
    %v1349 = vpack.c.b16 %v1123, %v1121
    %v1350 = vpack.c.b16 %v1126, %v1124
    %v1351 = vpack.c.b16 %v1127, %v1125
    %v1352 = vpack.c.b16 %v1130, %v1128
    %v1353 = vpack.c.b16 %v1131, %v1129
    %v1354 = vpack.c.b16 %v1134, %v1132
    %v1355 = vpack.c.b16 %v1135, %v1133
    %v1356 = vpack.c.b16 %v1138, %v1136
    %v1357 = vpack.c.b16 %v1139, %v1137
    %v1358 = vpack.c.b16 %v1142, %v1140
    %v1359 = vpack.c.b16 %v1143, %v1141
    %v1360 = vpack.c.b16 %v1146, %v1144
    %v1361 = vpack.c.b16 %v1147, %v1145
    %v1362 = vpack.c.b16 %v1150, %v1148
    %v1363 = vpack.c.b16 %v1151, %v1149
    %v1364 = vpack.c.b16 %v1154, %v1152
    %v1365 = vpack.c.b16 %v1155, %v1153
    %v1366 = vpack.c.b16 %v1158, %v1156
    %v1367 = vpack.c.b16 %v1159, %v1157
    %v1368 = vpack.c.b16 %v1162, %v1160
    %v1369 = vpack.c.b16 %v1163, %v1161
    %v1370 = vpack.c.b16 %v1166, %v1164
    %v1371 = vpack.c.b16 %v1167, %v1165
    %v1372 = vpack.c.b16 %v1170, %v1168
    %v1373 = vpack.c.b16 %v1171, %v1169
    %v1374 = vpack.c.b16 %v1174, %v1172
    %v1375 = vpack.c.b16 %v1175, %v1173
    %v1376 = vpack.c.b16 %v1178, %v1176
    %v1377 = vpack.c.b16 %v1179, %v1177
    %v1378 = vpack.c.b16 %v1182, %v1180
    %v1379 = vpack.c.b16 %v1183, %v1181
    %v1380 = vpack.c.b16 %v1186, %v1184
    %v1381 = vpack.c.b16 %v1187, %v1185
    %v1382 = vpack.c.b16 %v1190, %v1188
    %v1383 = vpack.c.b16 %v1191, %v1189
    %v1384 = vpack.c.b16 %v1194, %v1192
    %v1385 = vpack.c.b16 %v1195, %v1193
    %v1386 = vpack.c.b16 %v1198, %v1196
    %v1387 = vpack.c.b16 %v1199, %v1197
    %v1388 = vpack.c.b16 %v1202, %v1200
    %v1389 = vpack.c.b16 %v1203, %v1201
    %v1390 = vpack.c.b16 %v1206, %v1204
    %v1391 = vpack.c.b16 %v1207, %v1205
    %v1392 = vpack.c.b16 %v1210, %v1208
    %v1393 = vpack.c.b16 %v1211, %v1209
    %v1394 = vpack.c.b16 %v1214, %v1212
    %v1395 = vpack.c.b16 %v1215, %v1213
    %v1396 = vpack.c.b16 %v1218, %v1216
    %v1397 = vpack.c.b16 %v1219, %v1217
    %v1398 = vpack.c.b16 %v1222, %v1220
    %v1399 = vpack.c.b16 %v1223, %v1221
    %v1400 = vpack.c.b16 %v1226, %v1224
    %v1401 = vpack.c.b16 %v1227, %v1225
    %v1402 = vpack.c.b16 %v1230, %v1228
    %v1403 = vpack.c.b16 %v1231, %v1229
    %v1404 = vpack.c.b16 %v1234, %v1232
    %v1405 = vpack.c.b16 %v1235, %v1233
    %v1406 = vpack.c.b16 %v1238, %v1236
    %v1407 = vpack.c.b16 %v1239, %v1237
    %v1408 = vpack.c.b16 %v1242, %v1240
    %v1409 = vpack.c.b16 %v1243, %v1241
    %v1410 = vpack.c.b16 %v1246, %v1244
    %v1411 = vpack.c.b16 %v1247, %v1245
    %v1412 = vpack.c.b16 %v1250, %v1248
    %v1413 = vpack.c.b16 %v1251, %v1249
    %v1414 = vpack.c.b16 %v1254, %v1252
    %v1415 = vpack.c.b16 %v1255, %v1253
    %v1416 = vpack.c.b16 %v1258, %v1256
    %v1417 = vpack.c.b16 %v1259, %v1257
    %v1418 = vpack.c.b16 %v1262, %v1260
    %v1419 = vpack.c.b16 %v1263, %v1261
    %v1420 = vpack.c.b16 %v1266, %v1264
    %v1421 = vpack.c.b16 %v1267, %v1265
    %v1422 = vpack.c.b16 %v1270, %v1268
    %v1423 = vpack.c.b16 %v1271, %v1269
    %v1424 = vpack.c.b16 %v1274, %v1272
    %v1425 = vpack.c.b16 %v1275, %v1273
    %v1426 = vpack.c.b16 %v1278, %v1276
    %v1427 = vpack.c.b16 %v1279, %v1277
    %v1428 = vpack.c.b16 %v1282, %v1280
    %v1429 = vpack.c.b16 %v1283, %v1281
    %v1430 = vpack.c.b16 %v1286, %v1284
    %v1431 = vpack.c.b16 %v1287, %v1285
    %v1432 = vpack.c.b16 %v1290, %v1288
    %v1433 = vpack.c.b16 %v1291, %v1289
    %v1434 = vpack.c.b16 %v1294, %v1292
    %v1435 = vpack.c.b16 %v1295, %v1293
    %v1436 = vpack.c.b16 %v1298, %v1296
    %v1437 = vpack.c.b16 %v1299, %v1297
    %v1438 = vpack.c.b16 %v1302, %v1300
    %v1439 = vpack.c.b16 %v1303, %v1301
    %v1440 = vpack.c.b16 %v1306, %v1304
    %v1441 = vpack.c.b16 %v1307, %v1305
    %v1442 = vpack.c.b16 %v1310, %v1308
    %v1443 = vpack.c.b16 %v1311, %v1309
    %v1444 = vpack.c.b16 %v1314, %v1312
    %v1445 = vpack.c.b16 %v1315, %v1313
    %v1446 = vpack.c.b16 %v1318, %v1316
    %v1447 = vpack.c.b16 %v1319, %v1317
    %1576 = vmatprep.subr.bf16.mxu0 %v1321
    %1577 = vmatpush1.bf16.msra.mxu0 %v1320
    %1578 = vmatprep.subr.bf16.mxu0 %v1323
    %1579 = vmatpush1.bf16.msra.mxu0 %v1322
    %1580 = vmatprep.subr.bf16.mxu0 %v1325
    %1581 = vmatpush1.bf16.msra.mxu0 %v1324
    %1582 = vmatprep.subr.bf16.mxu0 %v1327
    %1583 = vmatpush1.bf16.msra.mxu0 %v1326
    %1584 = vmatprep.subr.bf16.mxu0 %v1329
    %1585 = vmatpush1.bf16.msra.mxu0 %v1328
    %1586 = vmatprep.subr.bf16.mxu0 %v1331
    %1587 = vmatpush1.bf16.msra.mxu0 %v1330
    %1588 = vmatprep.subr.bf16.mxu0 %v1333
    %1589 = vmatpush1.bf16.msra.mxu0 %v1332
    %1590 = vmatprep.subr.bf16.mxu0 %v1335
    %1591 = vmatpush1.bf16.msra.mxu0 %v1334
    %1592 = vmatprep.subr.bf16.mxu0 %v1337
    %1593 = vmatpush1.bf16.msra.mxu0 %v1336
    %1594 = vmatprep.subr.bf16.mxu0 %v1339
    %1595 = vmatpush1.bf16.msra.mxu0 %v1338
    %1596 = vmatprep.subr.bf16.mxu0 %v1341
    %1597 = vmatpush1.bf16.msra.mxu0 %v1340
    %1598 = vmatprep.subr.bf16.mxu0 %v1343
    %1599 = vmatpush1.bf16.msra.mxu0 %v1342
    %1600 = vmatprep.subr.bf16.mxu0 %v1345
    %1601 = vmatpush1.bf16.msra.mxu0 %v1344
    %1602 = vmatprep.subr.bf16.mxu0 %v1347
    %1603 = vmatpush1.bf16.msra.mxu0 %v1346
    %1604 = vmatprep.subr.bf16.mxu0 %v1349
    %1605 = vmatpush1.bf16.msra.mxu0 %v1348
    %1606 = vmatprep.subr.bf16.mxu0 %v1351
    %1607 = vmatpush1.bf16.msra.mxu0 %v1350
    %1608 = vmatprep.mubr.bf16.mxu0 %v789
    %1609 = vmatmul.mubr.bf16.gmra.mrb[0].mxu0 %v788
    %v1610 = vpop.f32.mrb[0].mxu0
    %v1611 = vadd.f32 %v929, %v1610
    %v1612 = vpop.f32.mrb[0].mxu0
    %v1613 = vadd.f32 %v933, %v1612
    %v1614 = vpop.f32.mrb[0].mxu0
    %v1615 = vadd.f32 %v929, %v1614
    %v1616 = vpop.f32.mrb[0].mxu0
    %v1617 = vadd.f32 %v933, %v1616
    %1618 = vdwg.mxu0
    %1619 = vmatprep.subr.bf16.mxu0 %v1353
    %1620 = vmatpush1.bf16.msra.mxu0 %v1352
    %1621 = vmatprep.subr.bf16.mxu0 %v1355
    %1622 = vmatpush1.bf16.msra.mxu0 %v1354
    %1623 = vmatprep.subr.bf16.mxu0 %v1357
    %1624 = vmatpush1.bf16.msra.mxu0 %v1356
    %1625 = vmatprep.subr.bf16.mxu0 %v1359
    %1626 = vmatpush1.bf16.msra.mxu0 %v1358
    %1627 = vmatprep.subr.bf16.mxu0 %v1361
    %1628 = vmatpush1.bf16.msra.mxu0 %v1360
    %1629 = vmatprep.subr.bf16.mxu0 %v1363
    %1630 = vmatpush1.bf16.msra.mxu0 %v1362
    %1631 = vmatprep.subr.bf16.mxu0 %v1365
    %1632 = vmatpush1.bf16.msra.mxu0 %v1364
    %1633 = vmatprep.subr.bf16.mxu0 %v1367
    %1634 = vmatpush1.bf16.msra.mxu0 %v1366
    %1635 = vmatprep.subr.bf16.mxu0 %v1369
    %1636 = vmatpush1.bf16.msra.mxu0 %v1368
    %1637 = vmatprep.subr.bf16.mxu0 %v1371
    %1638 = vmatpush1.bf16.msra.mxu0 %v1370
    %1639 = vmatprep.subr.bf16.mxu0 %v1373
    %1640 = vmatpush1.bf16.msra.mxu0 %v1372
    %1641 = vmatprep.subr.bf16.mxu0 %v1375
    %1642 = vmatpush1.bf16.msra.mxu0 %v1374
    %1643 = vmatprep.subr.bf16.mxu0 %v1377
    %1644 = vmatpush1.bf16.msra.mxu0 %v1376
    %1645 = vmatprep.subr.bf16.mxu0 %v1379
    %1646 = vmatpush1.bf16.msra.mxu0 %v1378
    %1647 = vmatprep.subr.bf16.mxu0 %v1381
    %1648 = vmatpush1.bf16.msra.mxu0 %v1380
    %1649 = vmatprep.subr.bf16.mxu0 %v1383
    %1650 = vmatpush1.bf16.msra.mxu0 %v1382
    %1651 = vmatprep.mubr.bf16.mxu0 %v791
    %1652 = vmatmul.mubr.bf16.gmra.mrb[0].mxu0 %v790
    %v1653 = vpop.f32.mrb[0].mxu0
    %v1654 = vadd.f32 %v1611, %v1653
    %v1655 = vpop.f32.mrb[0].mxu0
    %v1656 = vadd.f32 %v1613, %v1655
    %v1657 = vpop.f32.mrb[0].mxu0
    %v1658 = vadd.f32 %v1615, %v1657
    %v1659 = vpop.f32.mrb[0].mxu0
    %v1660 = vadd.f32 %v1617, %v1659
    %1661 = vdwg.mxu0
    %1662 = vmatprep.subr.bf16.mxu0 %v1385
    %1663 = vmatpush1.bf16.msra.mxu0 %v1384
    %1664 = vmatprep.subr.bf16.mxu0 %v1387
    %1665 = vmatpush1.bf16.msra.mxu0 %v1386
    %1666 = vmatprep.subr.bf16.mxu0 %v1389
    %1667 = vmatpush1.bf16.msra.mxu0 %v1388
    %1668 = vmatprep.subr.bf16.mxu0 %v1391
    %1669 = vmatpush1.bf16.msra.mxu0 %v1390
    %1670 = vmatprep.subr.bf16.mxu0 %v1393
    %1671 = vmatpush1.bf16.msra.mxu0 %v1392
    %1672 = vmatprep.subr.bf16.mxu0 %v1395
    %1673 = vmatpush1.bf16.msra.mxu0 %v1394
    %1674 = vmatprep.subr.bf16.mxu0 %v1397
    %1675 = vmatpush1.bf16.msra.mxu0 %v1396
    %1676 = vmatprep.subr.bf16.mxu0 %v1399
    %1677 = vmatpush1.bf16.msra.mxu0 %v1398
    %1678 = vmatprep.subr.bf16.mxu0 %v1401
    %1679 = vmatpush1.bf16.msra.mxu0 %v1400
    %1680 = vmatprep.subr.bf16.mxu0 %v1403
    %1681 = vmatpush1.bf16.msra.mxu0 %v1402
    %1682 = vmatprep.subr.bf16.mxu0 %v1405
    %1683 = vmatpush1.bf16.msra.mxu0 %v1404
    %1684 = vmatprep.subr.bf16.mxu0 %v1407
    %1685 = vmatpush1.bf16.msra.mxu0 %v1406
    %1686 = vmatprep.subr.bf16.mxu0 %v1409
    %1687 = vmatpush1.bf16.msra.mxu0 %v1408
    %1688 = vmatprep.subr.bf16.mxu0 %v1411
    %1689 = vmatpush1.bf16.msra.mxu0 %v1410
    %1690 = vmatprep.subr.bf16.mxu0 %v1413
    %1691 = vmatpush1.bf16.msra.mxu0 %v1412
    %1692 = vmatprep.subr.bf16.mxu0 %v1415
    %1693 = vmatpush1.bf16.msra.mxu0 %v1414
    %1694 = vmatprep.mubr.bf16.mxu0 %v793
    %1695 = vmatmul.mubr.bf16.gmra.mrb[0].mxu0 %v792
    %v1696 = vpop.f32.mrb[0].mxu0
    %v1697 = vadd.f32 %v1654, %v1696
    %v1698 = vpop.f32.mrb[0].mxu0
    %v1699 = vadd.f32 %v1656, %v1698
    %v1700 = vpop.f32.mrb[0].mxu0
    %v1701 = vadd.f32 %v1658, %v1700
    %v1702 = vpop.f32.mrb[0].mxu0
    %v1703 = vadd.f32 %v1660, %v1702
    %1704 = vdwg.mxu0
    %1705 = vmatprep.subr.bf16.mxu0 %v1417
    %1706 = vmatpush1.bf16.msra.mxu0 %v1416
    %1707 = vmatprep.subr.bf16.mxu0 %v1419
    %1708 = vmatpush1.bf16.msra.mxu0 %v1418
    %1709 = vmatprep.subr.bf16.mxu0 %v1421
    %1710 = vmatpush1.bf16.msra.mxu0 %v1420
    %1711 = vmatprep.subr.bf16.mxu0 %v1423
    %1712 = vmatpush1.bf16.msra.mxu0 %v1422
    %1713 = vmatprep.subr.bf16.mxu0 %v1425
    %1714 = vmatpush1.bf16.msra.mxu0 %v1424
    %1715 = vmatprep.subr.bf16.mxu0 %v1427
    %1716 = vmatpush1.bf16.msra.mxu0 %v1426
    %1717 = vmatprep.subr.bf16.mxu0 %v1429
    %1718 = vmatpush1.bf16.msra.mxu0 %v1428
    %1719 = vmatprep.subr.bf16.mxu0 %v1431
    %1720 = vmatpush1.bf16.msra.mxu0 %v1430
    %1721 = vmatprep.subr.bf16.mxu0 %v1433
    %1722 = vmatpush1.bf16.msra.mxu0 %v1432
    %1723 = vmatprep.subr.bf16.mxu0 %v1435
    %1724 = vmatpush1.bf16.msra.mxu0 %v1434
    %1725 = vmatprep.subr.bf16.mxu0 %v1437
    %1726 = vmatpush1.bf16.msra.mxu0 %v1436
    %1727 = vmatprep.subr.bf16.mxu0 %v1439
    %1728 = vmatpush1.bf16.msra.mxu0 %v1438
    %1729 = vmatprep.subr.bf16.mxu0 %v1441
    %1730 = vmatpush1.bf16.msra.mxu0 %v1440
    %1731 = vmatprep.subr.bf16.mxu0 %v1443
    %1732 = vmatpush1.bf16.msra.mxu0 %v1442
    %1733 = vmatprep.subr.bf16.mxu0 %v1445
    %1734 = vmatpush1.bf16.msra.mxu0 %v1444
    %1735 = vmatprep.subr.bf16.mxu0 %v1447
    %1736 = vmatpush1.bf16.msra.mxu0 %v1446
    %1737 = vmatprep.mubr.bf16.mxu0 %v795
    %1738 = vmatmul.mubr.bf16.gmra.mrb[0].mxu0 %v794
    %v1739 = vpop.f32.mrb[0].mxu0
    %v1740 = vadd.f32 %v1697, %v1739
    %v1741 = vpop.f32.mrb[0].mxu0
    %v1742 = vadd.f32 %v1699, %v1741
    %v1743 = vpop.f32.mrb[0].mxu0
    %v1744 = vadd.f32 %v1701, %v1743
    %v1745 = vpop.f32.mrb[0].mxu0
    %v1746 = vadd.f32 %v1703, %v1745
    %1747 = vdwg.mxu0
    %v1748 = vmax.f32 %v1740, 0.0
    %v1749 = vmax.f32 %v1742, 0.0
    %v1750 = vmax.f32 %v1744, 0.0
    %v1751 = vmax.f32 %v1746, 0.0
    %v1752 = vpack.c.bf16 %v1750, %v1748
    %v1753 = vpack.c.bf16 %v1751, %v1749
    %v1754 = vld [vmem:[%s7] sm:$0xf]
    %v1755 = vld [vmem:[%s7 + $0x4] sm:$0xf]
    %v1756 = vld [vmem:[%s7 + $0x8] sm:$0xf]
    %v1757 = vld [vmem:[%s7 + $0xc] sm:$0xf]
    %v1758 = vld [vmem:[%s7 + $0x10] sm:$0xf]
    %v1759 = vld [vmem:[%s7 + $0x14] sm:$0xf]
    %v1760 = vld [vmem:[%s7 + $0x18] sm:$0xf]
    %v1761 = vld [vmem:[%s7 + $0x1c] sm:$0xf]
    %v1762 = vld [vmem:[%s7 + $0x20] sm:$0xf]
    %v1763 = vld [vmem:[%s7 + $0x24] sm:$0xf]
    %v1764 = vld [vmem:[%s7 + $0x28] sm:$0xf]
    %v1765 = vld [vmem:[%s7 + $0x2c] sm:$0xf]
    %v1766 = vld [vmem:[%s7 + $0x30] sm:$0xf]
    %v1767 = vld [vmem:[%s7 + $0x34] sm:$0xf]
    %v1768 = vld [vmem:[%s7 + $0x38] sm:$0xf]
    %v1769 = vld [vmem:[%s7 + $0x3c] sm:$0xf]
    %v1770 = vld [vmem:[%s7 + $0x40] sm:$0xf]
    %v1771 = vld [vmem:[%s7 + $0x44] sm:$0xf]
    %v1772 = vld [vmem:[%s7 + $0x48] sm:$0xf]
    %v1773 = vld [vmem:[%s7 + $0x4c] sm:$0xf]
    %v1774 = vld [vmem:[%s7 + $0x50] sm:$0xf]
    %v1775 = vld [vmem:[%s7 + $0x54] sm:$0xf]
    %v1776 = vld [vmem:[%s7 + $0x58] sm:$0xf]
    %v1777 = vld [vmem:[%s7 + $0x5c] sm:$0xf]
    %v1778 = vld [vmem:[%s7 + $0x60] sm:$0xf]
    %v1779 = vld [vmem:[%s7 + $0x64] sm:$0xf]
    %v1780 = vld [vmem:[%s7 + $0x68] sm:$0xf]
    %v1781 = vld [vmem:[%s7 + $0x6c] sm:$0xf]
    %v1782 = vld [vmem:[%s7 + $0x70] sm:$0xf]
    %v1783 = vld [vmem:[%s7 + $0x74] sm:$0xf]
    %v1784 = vld [vmem:[%s7 + $0x78] sm:$0xf]
    %v1785 = vld [vmem:[%s7 + $0x7c] sm:$0xf]
    %v1786 = vld [vmem:[%s8] sm:$0x1]
    %v1788 = vlaneseq
    %v1789 = vshrl.u32 %v1788, 7
    %v1790 = vsub.s32 0, %v1789
    %v1791 = vrot.slane %v1786, %v1790
    %v1825 = vunpack.c.l.b16 %v1754
    %v1826 = vunpack.c.l.b16 %v1755
    %v1827 = vunpack.c.l.b16 %v1756
    %v1828 = vunpack.c.l.b16 %v1757
    %v1829 = vunpack.c.l.b16 %v1758
    %v1830 = vunpack.c.l.b16 %v1759
    %v1831 = vunpack.c.l.b16 %v1760
    %v1832 = vunpack.c.l.b16 %v1761
    %v1833 = vunpack.c.l.b16 %v1762
    %v1834 = vunpack.c.l.b16 %v1763
    %v1835 = vunpack.c.l.b16 %v1764
    %v1836 = vunpack.c.l.b16 %v1765
    %v1837 = vunpack.c.l.b16 %v1766
    %v1838 = vunpack.c.l.b16 %v1767
    %v1839 = vunpack.c.l.b16 %v1768
    %v1840 = vunpack.c.l.b16 %v1769
    %v1841 = vunpack.c.l.b16 %v1770
    %v1842 = vunpack.c.l.b16 %v1771
    %v1843 = vunpack.c.l.b16 %v1772
    %v1844 = vunpack.c.l.b16 %v1773
    %v1845 = vunpack.c.l.b16 %v1774
    %v1846 = vunpack.c.l.b16 %v1775
    %v1847 = vunpack.c.l.b16 %v1776
    %v1848 = vunpack.c.l.b16 %v1777
    %v1849 = vunpack.c.l.b16 %v1778
    %v1850 = vunpack.c.l.b16 %v1779
    %v1851 = vunpack.c.l.b16 %v1780
    %v1852 = vunpack.c.l.b16 %v1781
    %v1853 = vunpack.c.l.b16 %v1782
    %v1854 = vunpack.c.l.b16 %v1783
    %v1855 = vunpack.c.l.b16 %v1784
    %v1856 = vunpack.c.l.b16 %v1785
    %v1857 = vpack.c.b16 %v1826, %v1825
    %v1858 = vpack.c.b16 %v1828, %v1827
    %v1859 = vpack.c.b16 %v1830, %v1829
    %v1860 = vpack.c.b16 %v1832, %v1831
    %v1861 = vpack.c.b16 %v1834, %v1833
    %v1862 = vpack.c.b16 %v1836, %v1835
    %v1863 = vpack.c.b16 %v1838, %v1837
    %v1864 = vpack.c.b16 %v1840, %v1839
    %v1865 = vpack.c.b16 %v1842, %v1841
    %v1866 = vpack.c.b16 %v1844, %v1843
    %v1867 = vpack.c.b16 %v1846, %v1845
    %v1868 = vpack.c.b16 %v1848, %v1847
    %v1869 = vpack.c.b16 %v1850, %v1849
    %v1870 = vpack.c.b16 %v1852, %v1851
    %v1871 = vpack.c.b16 %v1854, %v1853
    %v1872 = vpack.c.b16 %v1856, %v1855
    %1889 = vmatprep.subr.bf16.mxu0 0
    %1890 = vmatpush1.bf16.msra.mxu0 %v1857
    %1891 = vmatprep.subr.bf16.mxu0 0
    %1892 = vmatpush1.bf16.msra.mxu0 %v1858
    %1893 = vmatprep.subr.bf16.mxu0 0
    %1894 = vmatpush1.bf16.msra.mxu0 %v1859
    %1895 = vmatprep.subr.bf16.mxu0 0
    %1896 = vmatpush1.bf16.msra.mxu0 %v1860
    %1897 = vmatprep.subr.bf16.mxu0 0
    %1898 = vmatpush1.bf16.msra.mxu0 %v1861
    %1899 = vmatprep.subr.bf16.mxu0 0
    %1900 = vmatpush1.bf16.msra.mxu0 %v1862
    %1901 = vmatprep.subr.bf16.mxu0 0
    %1902 = vmatpush1.bf16.msra.mxu0 %v1863
    %1903 = vmatprep.subr.bf16.mxu0 0
    %1904 = vmatpush1.bf16.msra.mxu0 %v1864
    %1905 = vmatprep.subr.bf16.mxu0 0
    %1906 = vmatpush1.bf16.msra.mxu0 %v1865
    %1907 = vmatprep.subr.bf16.mxu0 0
    %1908 = vmatpush1.bf16.msra.mxu0 %v1866
    %1909 = vmatprep.subr.bf16.mxu0 0
    %1910 = vmatpush1.bf16.msra.mxu0 %v1867
    %1911 = vmatprep.subr.bf16.mxu0 0
    %1912 = vmatpush1.bf16.msra.mxu0 %v1868
    %1913 = vmatprep.subr.bf16.mxu0 0
    %1914 = vmatpush1.bf16.msra.mxu0 %v1869
    %1915 = vmatprep.subr.bf16.mxu0 0
    %1916 = vmatpush1.bf16.msra.mxu0 %v1870
    %1917 = vmatprep.subr.bf16.mxu0 0
    %1918 = vmatpush1.bf16.msra.mxu0 %v1871
    %1919 = vmatprep.subr.bf16.mxu0 0
    %1920 = vmatpush1.bf16.msra.mxu0 %v1872
    %1921 = vmatprep.mubr.bf16.mxu0 %v1753
    %1922 = vmatmul.mubr.bf16.gmra.mrb[0].mxu0 %v1752
    %v1923 = vpop.f32.mrb[0].mxu0
    %v1924 = vadd.f32 %v1791, %v1923
    %v1925 = vpop.f32.mrb[0].mxu0
    %v1926 = vpop.f32.mrb[0].mxu0
    %v1927 = vadd.f32 %v1791, %v1926
    %v1928 = vpop.f32.mrb[0].mxu0
    %1929 = vdwg.mxu0
    %1930 = vst [vmem:[#allocation7] sm:$0xff] %v1924
    %1931 = vst [vmem:[#allocation7 + $0x8] sm:$0xff] %v1927
    // Predicated region
    $region46: #{tpu_custom_call.1} parent=1 // pred_check
      _
    $region47: #{tpu_custom_call.1} parent=1 // pred_check_branch
      %1933 = sbr.rel (0) target = $region49
    $region48: #{tpu_custom_call.1} parent=1 // pred_region
      %s1935 = ssub.s32 256, 256
      %1936 = vsyncadd [#allocation4], %s1935
      %s1937 = sshll.u32 [#allocation7], 4
      %s1938 = int_to_ptr.vmem [resolvable:$true] %s1937
      %1943 = dma.vmem_to_hbm [thread:$0]  %s1938, 256, %s9, [#allocation4], 128, 128, 8
    $region49: #{tpu_custom_call.1} parent=1 // pred_fallthru
      _
    // Predicated region
    $region50: #{tpu_custom_call.1} parent=1 // pred_check
      _
    $region51: #{tpu_custom_call.1} parent=1 // pred_check_branch
      %1945 = sbr.rel (0) target = $region53
    $region52: #{tpu_custom_call.1} parent=1 // pred_region
      %1946 = dma.done [#allocation4], 256
    $region53: #{tpu_custom_call.1} parent=1 // pred_fallthru
      _
    %1947 = vsyncpa [#allocation3], 1
    %1948 = vsyncpa [#allocation6], 1
    %1949 = vsyncpa [#allocation4], 1

</llo_original>
